<compile_context>
chip_gen: v5e
topology: v5e:2x2
jax: 0.10.0
libtpu: 0.0.40
codegen_flags: <defaults>
</compile_context>

<pallas_src>
import jax
import jax.numpy as jnp
from jax.experimental import pallas as pl
from jax.experimental.pallas import tpu as pltpu


def _make_kernel(H, W, Cin, hidden, Cout, stride, use_res):
    assert stride in (1, 2)
    Ho = (H + 2 - 3) // stride + 1
    Wo = (W + 2 - 3) // stride + 1

    def kernel(x_ref, w1_ref, b1_ref, dw_ref, b2_ref, w3_ref, b3_ref,
               o_ref, *scratch):
        x = x_ref[0].astype(jnp.float32)                 # (H, W, Cin)
        x_flat = x.reshape(H * W, Cin)

        # ---- 1x1 expand conv (BN1 scale folded into w1) + bias + ReLU (MXU) ----
        h = jnp.dot(x_flat, w1_ref[...], preferred_element_type=jnp.float32)
        h = jnp.maximum(h + b1_ref[...], 0.0)            # (H*W, hidden)
        h3 = h.reshape(H, W, hidden)

        dwv = dw_ref[...]                                # (9, hidden), BN2 folded

        if stride == 1:
            (hp_ref,) = scratch                          # (H+2, W+2, hidden)
            # Zero only the 1-pixel halo slivers (cheap); redone every grid
            # step so correctness holds under "parallel" megacore sharding.
            hp_ref[0:1, :, :] = jnp.zeros((1, W + 2, hidden), jnp.float32)
            hp_ref[H + 1:H + 2, :, :] = jnp.zeros((1, W + 2, hidden), jnp.float32)
            hp_ref[:, 0:1, :] = jnp.zeros((H + 2, 1, hidden), jnp.float32)
            hp_ref[:, W + 1:W + 2, :] = jnp.zeros((H + 2, 1, hidden), jnp.float32)
            hp_ref[1:H + 1, 1:W + 1, :] = h3

            # 9 depthwise taps = shifted window loads from VMEM scratch.
            acc = hp_ref[0:H, 0:W, :] * dwv[0]
            for di in range(3):
                for dj in range(3):
                    if di == 0 and dj == 0:
                        continue
                    acc = acc + hp_ref[di:di + H, dj:dj + W, :] * dwv[3 * di + dj]
        else:
            # stride == 2: split the expanded activations into (row, col)
            # parity planes; every 3x3 tap becomes a plain shifted window over
            # an (Ho, Wo) plane, so only Ho*Wo outputs are ever accumulated.
            ee_ref, eo_ref, oe_ref, oo_ref = scratch
            h5 = h3.reshape(Ho, 2, W, hidden)
            h_ev = jax.lax.slice_in_dim(h5, 0, 1, axis=1).reshape(Ho, W, hidden)
            h_od = jax.lax.slice_in_dim(h5, 1, 2, axis=1).reshape(Ho, W, hidden)
            he4 = h_ev.reshape(Ho, Wo, 2, hidden)
            ho4 = h_od.reshape(Ho, Wo, 2, hidden)
            ee = jax.lax.slice_in_dim(he4, 0, 1, axis=2).reshape(Ho, Wo, hidden)
            eo = jax.lax.slice_in_dim(he4, 1, 2, axis=2).reshape(Ho, Wo, hidden)
            oe = jax.lax.slice_in_dim(ho4, 0, 1, axis=2).reshape(Ho, Wo, hidden)
            oo = jax.lax.slice_in_dim(ho4, 1, 2, axis=2).reshape(Ho, Wo, hidden)

            # Zero-pad borders (only where a shifted read can fall off-edge).
            oo_ref[0:1, :, :] = jnp.zeros((1, Wo + 1, hidden), jnp.float32)
            oo_ref[:, 0:1, :] = jnp.zeros((Ho + 1, 1, hidden), jnp.float32)
            oe_ref[0:1, :, :] = jnp.zeros((1, Wo, hidden), jnp.float32)
            eo_ref[:, 0:1, :] = jnp.zeros((Ho, 1, hidden), jnp.float32)

            ee_ref[...] = ee
            eo_ref[0:Ho, 1:Wo + 1, :] = eo
            oe_ref[1:Ho + 1, 0:Wo, :] = oe
            oo_ref[1:Ho + 1, 1:Wo + 1, :] = oo

            acc = oo_ref[0:Ho, 0:Wo, :] * dwv[0]                 # tap (0,0)
            acc = acc + oe_ref[0:Ho, 0:Wo, :] * dwv[1]           # tap (0,1)
            acc = acc + oo_ref[0:Ho, 1:Wo + 1, :] * dwv[2]       # tap (0,2)
            acc = acc + eo_ref[0:Ho, 0:Wo, :] * dwv[3]           # tap (1,0)
            acc = acc + ee_ref[...] * dwv[4]                     # tap (1,1)
            acc = acc + eo_ref[0:Ho, 1:Wo + 1, :] * dwv[5]       # tap (1,2)
            acc = acc + oo_ref[1:Ho + 1, 0:Wo, :] * dwv[6]       # tap (2,0)
            acc = acc + oe_ref[1:Ho + 1, 0:Wo, :] * dwv[7]       # tap (2,1)
            acc = acc + oo_ref[1:Ho + 1, 1:Wo + 1, :] * dwv[8]   # tap (2,2)

        # ---- BN2 bias + ReLU, then 1x1 project conv (BN3 scale folded) ----
        y = jnp.maximum(acc.reshape(Ho * Wo, hidden) + b2_ref[...], 0.0)
        out = jnp.dot(y, w3_ref[...], preferred_element_type=jnp.float32)
        out = out + b3_ref[...]

        if use_res:                                      # stride==1 and Cin==Cout
            out = out + x_flat

        o_ref[0] = out.reshape(Ho, Wo, Cout).astype(o_ref.dtype)

    return kernel, Ho, Wo


def fold_bn_params(params):
    """One-time weight transform: fold eval-mode BN scales into conv weights."""
    w1, s1, b1, dw, s2, b2, w3, s3, b3 = params
    hidden = w1.shape[1]
    w1f = (w1 * s1).astype(jnp.float32)                        # (Cin, hidden)
    dwf = (dw * s2.reshape(1, 1, hidden)).reshape(9, hidden)   # (9, hidden)
    w3f = (w3 * s3).astype(jnp.float32)                        # (hidden, oup)
    return (w1f, b1.astype(jnp.float32), dwf.astype(jnp.float32),
            b2.astype(jnp.float32), w3f, b3.astype(jnp.float32))


def inverted_residual_pallas(x_nchw, params, stride, inp, oup, expand_ratio):
    w1f, b1, dwf, b2, w3f, b3 = fold_bn_params(params)
    N, Cin, H, W = x_nchw.shape
    assert Cin == inp
    hidden = inp * expand_ratio
    if stride == 2:
        # parity-split fast path assumes even spatial dims (true for MobileNetV2)
        assert H % 2 == 0 and W % 2 == 0, "stride-2 path requires even H and W"
    use_res = (stride == 1) and (inp == oup)
    kernel, Ho, Wo = _make_kernel(H, W, Cin, hidden, oup, stride, use_res)

    if stride == 1:
        scratch = [pltpu.VMEM((H + 2, W + 2, hidden), jnp.float32)]
        scratch_bytes = (H + 2) * (W + 2) * hidden * 4
    else:
        scratch = [pltpu.VMEM((Ho, Wo, hidden), jnp.float32),
                   pltpu.VMEM((Ho, Wo + 1, hidden), jnp.float32),
                   pltpu.VMEM((Ho + 1, Wo, hidden), jnp.float32),
                   pltpu.VMEM((Ho + 1, Wo + 1, hidden), jnp.float32)]
        scratch_bytes = (Ho * Wo + Ho * (Wo + 1) + (Ho + 1) * Wo
                         + (Ho + 1) * (Wo + 1)) * hidden * 4

    # Explicit scoped-VMEM budget (double-buffered I/O blocks + weights +
    # scratch + live intermediates) with 2x headroom.
    blk_bytes = (H * W * Cin + Ho * Wo * oup) * 4 * 2
    w_bytes = (Cin * hidden + 9 * hidden + hidden * oup + 2 * hidden + oup) * 4 * 2
    live_bytes = (H * W * hidden + 3 * Ho * Wo * hidden) * 4
    vmem_limit = int(min(100 * 1024 * 1024,
                         max(32 * 1024 * 1024,
                             2 * (blk_bytes + w_bytes + scratch_bytes + live_bytes))))

    x_nhwc = jnp.transpose(x_nchw, (0, 2, 3, 1))               # NCHW -> NHWC

    out_nhwc = pl.pallas_call(
        kernel,
        out_shape=jax.ShapeDtypeStruct((N, Ho, Wo, oup), x_nhwc.dtype),
        grid_spec=pltpu.PrefetchScalarGridSpec(
            num_scalar_prefetch=0,
            grid=(N,),
            in_specs=[
                pl.BlockSpec((1, H, W, Cin), lambda n: (n, 0, 0, 0)),
                pl.BlockSpec((Cin, hidden), lambda n: (0, 0)),
                pl.BlockSpec((1, hidden), lambda n: (0, 0)),
                pl.BlockSpec((9, hidden), lambda n: (0, 0)),
                pl.BlockSpec((1, hidden), lambda n: (0, 0)),
                pl.BlockSpec((hidden, oup), lambda n: (0, 0)),
                pl.BlockSpec((1, oup), lambda n: (0, 0)),
            ],
            out_specs=pl.BlockSpec((1, Ho, Wo, oup), lambda n: (n, 0, 0, 0)),
            scratch_shapes=scratch,
        ),
        compiler_params=pltpu.CompilerParams(
            dimension_semantics=("parallel",),
            vmem_limit_bytes=vmem_limit),
    )(x_nhwc, w1f, b1, dwf, b2, w3f, b3)

    return jnp.transpose(out_nhwc, (0, 3, 1, 2))               # NHWC -> NCHW


def make_params(key, inp, oup, expand_ratio):
    """Deterministic synthetic parameters; BN as (scale, bias) from running stats."""
    hidden = inp * expand_ratio
    ks = jax.random.split(key, 15)
    w1 = jax.random.normal(ks[0], (inp, hidden), jnp.float32) * 0.2   # 1x1 expand
    dw = jax.random.normal(ks[1], (3, 3, hidden), jnp.float32) * 0.2  # depthwise
    w3 = jax.random.normal(ks[2], (hidden, oup), jnp.float32) * 0.2   # 1x1 project

    def bn(kg, kb, km, kv, c):
        gamma = jax.random.uniform(kg, (c,), jnp.float32, 0.5, 1.5)
        beta = jax.random.normal(kb, (c,), jnp.float32) * 0.1
        mean = jax.random.normal(km, (c,), jnp.float32) * 0.1
        var = jax.random.uniform(kv, (c,), jnp.float32, 0.5, 1.5)
        scale = gamma / jnp.sqrt(var + 1e-5)
        bias = beta - mean * scale
        return scale.reshape(1, c), bias.reshape(1, c)

    s1, b1 = bn(ks[3], ks[4], ks[5], ks[6], hidden)
    s2, b2 = bn(ks[7], ks[8], ks[9], ks[10], hidden)
    s3, b3 = bn(ks[11], ks[12], ks[13], ks[14], oup)
    return (w1, s1, b1, dw, s2, b2, w3, s3, b3)


def ref_inverted_residual(x_nchw, params, stride, use_res):
    """Pure-JAX reference on the UNFOLDED parameters (independent check)."""
    w1, s1, b1, dw, s2, b2, w3, s3, b3 = params
    hidden = w1.shape[1]
    x = jnp.transpose(x_nchw, (0, 2, 3, 1)).astype(jnp.float32)
    h = jnp.einsum('nhwc,cd->nhwd', x, w1)
    h = jnp.maximum(h * s1 + b1, 0.0)
    h = jax.lax.conv_general_dilated(
        h, dw.reshape(3, 3, 1, hidden), (stride, stride), ((1, 1), (1, 1)),
        dimension_numbers=('NHWC', 'HWIO', 'NHWC'), feature_group_count=hidden)
    h = jnp.maximum(h * s2 + b2, 0.0)
    out = jnp.einsum('nhwc,cd->nhwd', h, w3) * s3 + b3
    if use_res:
        out = out + x
    return jnp.transpose(out, (0, 3, 1, 2))


if __name__ == "__main__":
    key = jax.random.PRNGKey(0)
    kx, kp1, kp2 = jax.random.split(key, 3)

    # Case 1: stride=1, inp == oup -> residual connection used.
    inp, oup, stride, expand = 4, 4, 1, 6
    x = jax.random.normal(kx, (2, inp, 16, 16), jnp.float32)
    params = make_params(kp1, inp, oup, expand)
    out = jax.block_until_ready(
        inverted_residual_pallas(x, params, stride, inp, oup, expand))
    ref = ref_inverted_residual(x, params, stride, use_res=True)
    assert out.shape == (2, oup, 16, 16)
    assert jnp.allclose(out, ref, atol=2e-4, rtol=2e-4), \
        float(jnp.max(jnp.abs(out - ref)))

    # Case 2: stride=2, inp != oup -> no residual.
    inp2, oup2, stride2, expand2 = 4, 8, 2, 6
    x2 = jax.random.normal(kx, (2, inp2, 16, 16), jnp.float32)
    params2 = make_params(kp2, inp2, oup2, expand2)
    out2 = jax.block_until_ready(
        inverted_residual_pallas(x2, params2, stride2, inp2, oup2, expand2))
    ref2 = ref_inverted_residual(x2, params2, stride2, use_res=False)
    assert out2.shape == (2, oup2, 8, 8)
    assert jnp.allclose(out2, ref2, atol=2e-4, rtol=2e-4), \
        float(jnp.max(jnp.abs(out2 - ref2)))

    print("KERNEL_OK")
</pallas_src>

<mosaic_0001>
module attributes {stable_mosaic.version = 11 : i64} {
  func.func @kernel(%arg0: i32, %arg1: memref<1x16x16x4xf32, #tpu.memory_space<vmem>>, %arg2: memref<4x24xf32, #tpu.memory_space<vmem>>, %arg3: memref<1x24xf32, #tpu.memory_space<vmem>>, %arg4: memref<9x24xf32, #tpu.memory_space<vmem>>, %arg5: memref<1x24xf32, #tpu.memory_space<vmem>>, %arg6: memref<24x4xf32, #tpu.memory_space<vmem>>, %arg7: memref<1x4xf32, #tpu.memory_space<vmem>>, %arg8: memref<1x16x16x4xf32, #tpu.memory_space<vmem>>, %arg9: memref<18x18x24xf32, #tpu.memory_space<vmem>>) attributes {dimension_semantics = [#tpu.dimension_semantics<parallel>], iteration_bounds = array<i64: 2>, scalar_prefetch = 0 : i64, scratch_operands = 1 : i64, tpu.core_type = #tpu.core_type<tc>, window_params = [{transform_indices = @transform_0, window_bounds = array<i64: 1, 16, 16, 4>}, {pipeline_mode = #tpu.pipeline_mode<synchronous>, transform_indices = @transform_1, window_bounds = array<i64: 4, 24>}, {pipeline_mode = #tpu.pipeline_mode<synchronous>, transform_indices = @transform_2, window_bounds = array<i64: 1, 24>}, {pipeline_mode = #tpu.pipeline_mode<synchronous>, transform_indices = @transform_3, window_bounds = array<i64: 9, 24>}, {pipeline_mode = #tpu.pipeline_mode<synchronous>, transform_indices = @transform_4, window_bounds = array<i64: 1, 24>}, {pipeline_mode = #tpu.pipeline_mode<synchronous>, transform_indices = @transform_5, window_bounds = array<i64: 24, 4>}, {pipeline_mode = #tpu.pipeline_mode<synchronous>, transform_indices = @transform_6, window_bounds = array<i64: 1, 4>}, {transform_indices = @transform_7, window_bounds = array<i64: 1, 16, 16, 4>}]} {
    %c0 = arith.constant 0 : index
    %c0_0 = arith.constant 0 : index
    %c0_1 = arith.constant 0 : index
    %c0_2 = arith.constant 0 : index
    %0 = vector.load %arg1[%c0, %c0_0, %c0_1, %c0_2] : memref<1x16x16x4xf32, #tpu.memory_space<vmem>>, vector<1x16x16x4xf32>
    %1 = vector.shape_cast %0 : vector<1x16x16x4xf32> to vector<16x16x4xf32>
    %2 = vector.shape_cast %1 : vector<16x16x4xf32> to vector<256x4xf32>
    %c0_3 = arith.constant 0 : index
    %c0_4 = arith.constant 0 : index
    %3 = vector.load %arg2[%c0_3, %c0_4] : memref<4x24xf32, #tpu.memory_space<vmem>>, vector<4x24xf32>
    %cst = arith.constant dense<0.000000e+00> : vector<256x24xf32>
    %4 = tpu.matmul %2, %3, %cst {dimension_numbers = #tpu.dot_dimension_numbers<[1], [0], [0], [1], [0, 0, 1, 1], [], []>} : vector<256x4xf32>, vector<4x24xf32>, vector<256x24xf32> -> vector<256x24xf32>
    %c0_5 = arith.constant 0 : index
    %c0_6 = arith.constant 0 : index
    %5 = vector.load %arg3[%c0_5, %c0_6] : memref<1x24xf32, #tpu.memory_space<vmem>>, vector<1x24xf32>
    %6 = vector.broadcast %5 : vector<1x24xf32> to vector<256x24xf32>
    %7 = arith.addf %4, %6 : vector<256x24xf32>
    %cst_7 = arith.constant 0.000000e+00 : f32
    %8 = vector.broadcast %cst_7 : f32 to vector<256x24xf32>
    %9 = arith.maximumf %7, %8 : vector<256x24xf32>
    %10 = vector.shape_cast %9 : vector<256x24xf32> to vector<16x16x24xf32>
    %c0_8 = arith.constant 0 : index
    %c0_9 = arith.constant 0 : index
    %11 = vector.load %arg4[%c0_8, %c0_9] : memref<9x24xf32, #tpu.memory_space<vmem>>, vector<9x24xf32>
    %cst_10 = arith.constant 0.000000e+00 : f32
    %12 = vector.broadcast %cst_10 : f32 to vector<1x18x24xf32>
    %c0_11 = arith.constant 0 : index
    %c0_12 = arith.constant 0 : index
    %c0_13 = arith.constant 0 : index
    %13 = vector.load %arg9[%c0_11, %c0_12, %c0_13] : memref<18x18x24xf32, #tpu.memory_space<vmem>>, vector<1x18x24xf32>
    tpu.vector_store %arg9[%c0_11, %c0_12, %c0_13], %12 {strides = array<i32>} : memref<18x18x24xf32, #tpu.memory_space<vmem>>, vector<1x18x24xf32>,
    %cst_14 = arith.constant 0.000000e+00 : f32
    %14 = vector.broadcast %cst_14 : f32 to vector<1x18x24xf32>
    %c17 = arith.constant 17 : index
    %c0_15 = arith.constant 0 : index
    %c0_16 = arith.constant 0 : index
    %15 = vector.load %arg9[%c17, %c0_15, %c0_16] : memref<18x18x24xf32, #tpu.memory_space<vmem>>, vector<1x18x24xf32>
    tpu.vector_store %arg9[%c17, %c0_15, %c0_16], %14 {strides = array<i32>} : memref<18x18x24xf32, #tpu.memory_space<vmem>>, vector<1x18x24xf32>,
    %cst_17 = arith.constant 0.000000e+00 : f32
    %16 = vector.broadcast %cst_17 : f32 to vector<18x1x24xf32>
    %c0_18 = arith.constant 0 : index
    %c0_19 = arith.constant 0 : index
    %c0_20 = arith.constant 0 : index
    %17 = vector.load %arg9[%c0_18, %c0_19, %c0_20] : memref<18x18x24xf32, #tpu.memory_space<vmem>>, vector<18x1x24xf32>
    tpu.vector_store %arg9[%c0_18, %c0_19, %c0_20], %16 {strides = array<i32>} : memref<18x18x24xf32, #tpu.memory_space<vmem>>, vector<18x1x24xf32>,
    %cst_21 = arith.constant 0.000000e+00 : f32
    %18 = vector.broadcast %cst_21 : f32 to vector<18x1x24xf32>
    %c0_22 = arith.constant 0 : index
    %c17_23 = arith.constant 17 : index
    %c0_24 = arith.constant 0 : index
    %19 = vector.load %arg9[%c0_22, %c17_23, %c0_24] : memref<18x18x24xf32, #tpu.memory_space<vmem>>, vector<18x1x24xf32>
    tpu.vector_store %arg9[%c0_22, %c17_23, %c0_24], %18 {strides = array<i32>} : memref<18x18x24xf32, #tpu.memory_space<vmem>>, vector<18x1x24xf32>,
    %c1 = arith.constant 1 : index
    %c1_25 = arith.constant 1 : index
    %c0_26 = arith.constant 0 : index
    %20 = vector.load %arg9[%c1, %c1_25, %c0_26] : memref<18x18x24xf32, #tpu.memory_space<vmem>>, vector<16x16x24xf32>
    tpu.vector_store %arg9[%c1, %c1_25, %c0_26], %10 {strides = array<i32>} : memref<18x18x24xf32, #tpu.memory_space<vmem>>, vector<16x16x24xf32>,
    %c0_27 = arith.constant 0 : index
    %c0_28 = arith.constant 0 : index
    %c0_29 = arith.constant 0 : index
    %21 = vector.load %arg9[%c0_27, %c0_28, %c0_29] : memref<18x18x24xf32, #tpu.memory_space<vmem>>, vector<16x16x24xf32>
    %22 = vector.extract_strided_slice %11 {offsets = [0, 0], sizes = [1, 24], strides = [1, 1]} : vector<9x24xf32> to vector<1x24xf32>
    %23 = vector.shape_cast %22 : vector<1x24xf32> to vector<24xf32>
    %24 = vector.shape_cast %23 : vector<24xf32> to vector<1x1x24xf32>
    %25 = vector.broadcast %24 : vector<1x1x24xf32> to vector<16x16x24xf32>
    %26 = arith.mulf %21, %25 : vector<16x16x24xf32>
    %c0_30 = arith.constant 0 : index
    %c1_31 = arith.constant 1 : index
    %c0_32 = arith.constant 0 : index
    %27 = vector.load %arg9[%c0_30, %c1_31, %c0_32] : memref<18x18x24xf32, #tpu.memory_space<vmem>>, vector<16x16x24xf32>
    %28 = vector.extract_strided_slice %11 {offsets = [1, 0], sizes = [1, 24], strides = [1, 1]} : vector<9x24xf32> to vector<1x24xf32>
    %29 = vector.shape_cast %28 : vector<1x24xf32> to vector<24xf32>
    %30 = vector.shape_cast %29 : vector<24xf32> to vector<1x1x24xf32>
    %31 = vector.broadcast %30 : vector<1x1x24xf32> to vector<16x16x24xf32>
    %32 = arith.mulf %27, %31 : vector<16x16x24xf32>
    %33 = arith.addf %26, %32 : vector<16x16x24xf32>
    %c0_33 = arith.constant 0 : index
    %c2 = arith.constant 2 : index
    %c0_34 = arith.constant 0 : index
    %34 = vector.load %arg9[%c0_33, %c2, %c0_34] : memref<18x18x24xf32, #tpu.memory_space<vmem>>, vector<16x16x24xf32>
    %35 = vector.extract_strided_slice %11 {offsets = [2, 0], sizes = [1, 24], strides = [1, 1]} : vector<9x24xf32> to vector<1x24xf32>
    %36 = vector.shape_cast %35 : vector<1x24xf32> to vector<24xf32>
    %37 = vector.shape_cast %36 : vector<24xf32> to vector<1x1x24xf32>
    %38 = vector.broadcast %37 : vector<1x1x24xf32> to vector<16x16x24xf32>
    %39 = arith.mulf %34, %38 : vector<16x16x24xf32>
    %40 = arith.addf %33, %39 : vector<16x16x24xf32>
    %c1_35 = arith.constant 1 : index
    %c0_36 = arith.constant 0 : index
    %c0_37 = arith.constant 0 : index
    %41 = vector.load %arg9[%c1_35, %c0_36, %c0_37] : memref<18x18x24xf32, #tpu.memory_space<vmem>>, vector<16x16x24xf32>
    %42 = vector.extract_strided_slice %11 {offsets = [3, 0], sizes = [1, 24], strides = [1, 1]} : vector<9x24xf32> to vector<1x24xf32>
    %43 = vector.shape_cast %42 : vector<1x24xf32> to vector<24xf32>
    %44 = vector.shape_cast %43 : vector<24xf32> to vector<1x1x24xf32>
    %45 = vector.broadcast %44 : vector<1x1x24xf32> to vector<16x16x24xf32>
    %46 = arith.mulf %41, %45 : vector<16x16x24xf32>
    %47 = arith.addf %40, %46 : vector<16x16x24xf32>
    %c1_38 = arith.constant 1 : index
    %c1_39 = arith.constant 1 : index
    %c0_40 = arith.constant 0 : index
    %48 = vector.load %arg9[%c1_38, %c1_39, %c0_40] : memref<18x18x24xf32, #tpu.memory_space<vmem>>, vector<16x16x24xf32>
    %49 = vector.extract_strided_slice %11 {offsets = [4, 0], sizes = [1, 24], strides = [1, 1]} : vector<9x24xf32> to vector<1x24xf32>
    %50 = vector.shape_cast %49 : vector<1x24xf32> to vector<24xf32>
    %51 = vector.shape_cast %50 : vector<24xf32> to vector<1x1x24xf32>
    %52 = vector.broadcast %51 : vector<1x1x24xf32> to vector<16x16x24xf32>
    %53 = arith.mulf %48, %52 : vector<16x16x24xf32>
    %54 = arith.addf %47, %53 : vector<16x16x24xf32>
    %c1_41 = arith.constant 1 : index
    %c2_42 = arith.constant 2 : index
    %c0_43 = arith.constant 0 : index
    %55 = vector.load %arg9[%c1_41, %c2_42, %c0_43] : memref<18x18x24xf32, #tpu.memory_space<vmem>>, vector<16x16x24xf32>
    %56 = vector.extract_strided_slice %11 {offsets = [5, 0], sizes = [1, 24], strides = [1, 1]} : vector<9x24xf32> to vector<1x24xf32>
    %57 = vector.shape_cast %56 : vector<1x24xf32> to vector<24xf32>
    %58 = vector.shape_cast %57 : vector<24xf32> to vector<1x1x24xf32>
    %59 = vector.broadcast %58 : vector<1x1x24xf32> to vector<16x16x24xf32>
    %60 = arith.mulf %55, %59 : vector<16x16x24xf32>
    %61 = arith.addf %54, %60 : vector<16x16x24xf32>
    %c2_44 = arith.constant 2 : index
    %c0_45 = arith.constant 0 : index
    %c0_46 = arith.constant 0 : index
    %62 = vector.load %arg9[%c2_44, %c0_45, %c0_46] : memref<18x18x24xf32, #tpu.memory_space<vmem>>, vector<16x16x24xf32>
    %63 = vector.extract_strided_slice %11 {offsets = [6, 0], sizes = [1, 24], strides = [1, 1]} : vector<9x24xf32> to vector<1x24xf32>
    %64 = vector.shape_cast %63 : vector<1x24xf32> to vector<24xf32>
    %65 = vector.shape_cast %64 : vector<24xf32> to vector<1x1x24xf32>
    %66 = vector.broadcast %65 : vector<1x1x24xf32> to vector<16x16x24xf32>
    %67 = arith.mulf %62, %66 : vector<16x16x24xf32>
    %68 = arith.addf %61, %67 : vector<16x16x24xf32>
    %c2_47 = arith.constant 2 : index
    %c1_48 = arith.constant 1 : index
    %c0_49 = arith.constant 0 : index
    %69 = vector.load %arg9[%c2_47, %c1_48, %c0_49] : memref<18x18x24xf32, #tpu.memory_space<vmem>>, vector<16x16x24xf32>
    %70 = vector.extract_strided_slice %11 {offsets = [7, 0], sizes = [1, 24], strides = [1, 1]} : vector<9x24xf32> to vector<1x24xf32>
    %71 = vector.shape_cast %70 : vector<1x24xf32> to vector<24xf32>
    %72 = vector.shape_cast %71 : vector<24xf32> to vector<1x1x24xf32>
    %73 = vector.broadcast %72 : vector<1x1x24xf32> to vector<16x16x24xf32>
    %74 = arith.mulf %69, %73 : vector<16x16x24xf32>
    %75 = arith.addf %68, %74 : vector<16x16x24xf32>
    %c2_50 = arith.constant 2 : index
    %c2_51 = arith.constant 2 : index
    %c0_52 = arith.constant 0 : index
    %76 = vector.load %arg9[%c2_50, %c2_51, %c0_52] : memref<18x18x24xf32, #tpu.memory_space<vmem>>, vector<16x16x24xf32>
    %77 = vector.extract_strided_slice %11 {offsets = [8, 0], sizes = [1, 24], strides = [1, 1]} : vector<9x24xf32> to vector<1x24xf32>
    %78 = vector.shape_cast %77 : vector<1x24xf32> to vector<24xf32>
    %79 = vector.shape_cast %78 : vector<24xf32> to vector<1x1x24xf32>
    %80 = vector.broadcast %79 : vector<1x1x24xf32> to vector<16x16x24xf32>
    %81 = arith.mulf %76, %80 : vector<16x16x24xf32>
    %82 = arith.addf %75, %81 : vector<16x16x24xf32>
    %83 = vector.shape_cast %82 : vector<16x16x24xf32> to vector<256x24xf32>
    %c0_53 = arith.constant 0 : index
    %c0_54 = arith.constant 0 : index
    %84 = vector.load %arg5[%c0_53, %c0_54] : memref<1x24xf32, #tpu.memory_space<vmem>>, vector<1x24xf32>
    %85 = vector.broadcast %84 : vector<1x24xf32> to vector<256x24xf32>
    %86 = arith.addf %83, %85 : vector<256x24xf32>
    %cst_55 = arith.constant 0.000000e+00 : f32
    %87 = vector.broadcast %cst_55 : f32 to vector<256x24xf32>
    %88 = arith.maximumf %86, %87 : vector<256x24xf32>
    %c0_56 = arith.constant 0 : index
    %c0_57 = arith.constant 0 : index
    %89 = vector.load %arg6[%c0_56, %c0_57] : memref<24x4xf32, #tpu.memory_space<vmem>>, vector<24x4xf32>
    %cst_58 = arith.constant dense<0.000000e+00> : vector<256x4xf32>
    %90 = tpu.matmul %88, %89, %cst_58 {dimension_numbers = #tpu.dot_dimension_numbers<[1], [0], [0], [1], [0, 0, 1, 1], [], []>} : vector<256x24xf32>, vector<24x4xf32>, vector<256x4xf32> -> vector<256x4xf32>
    %c0_59 = arith.constant 0 : index
    %c0_60 = arith.constant 0 : index
    %91 = vector.load %arg7[%c0_59, %c0_60] : memref<1x4xf32, #tpu.memory_space<vmem>>, vector<1x4xf32>
    %92 = vector.broadcast %91 : vector<1x4xf32> to vector<256x4xf32>
    %93 = arith.addf %90, %92 : vector<256x4xf32>
    %94 = arith.addf %93, %2 : vector<256x4xf32>
    %95 = vector.shape_cast %94 : vector<256x4xf32> to vector<16x16x4xf32>
    %c0_61 = arith.constant 0 : index
    %c0_62 = arith.constant 0 : index
    %c0_63 = arith.constant 0 : index
    %c0_64 = arith.constant 0 : index
    %96 = vector.load %arg8[%c0_61, %c0_62, %c0_63, %c0_64] : memref<1x16x16x4xf32, #tpu.memory_space<vmem>>, vector<1x16x16x4xf32>
    %97 = vector.shape_cast %96 : vector<1x16x16x4xf32> to vector<16x16x4xf32>
    %98 = vector.shape_cast %95 : vector<16x16x4xf32> to vector<1x16x16x4xf32>
    tpu.vector_store %arg8[%c0_61, %c0_62, %c0_63, %c0_64], %98 {strides = array<i32>} : memref<1x16x16x4xf32, #tpu.memory_space<vmem>>, vector<1x16x16x4xf32>,
    return
  }
  func.func @transform_0(%arg0: i32) -> (i32, i32, i32, i32) {
    %c0_i32 = arith.constant 0 : i32
    %c0_i32_0 = arith.constant 0 : i32
    %c0_i32_1 = arith.constant 0 : i32
    %c0_i32_2 = arith.constant 0 : i32
    return %arg0, %c0_i32, %c0_i32_0, %c0_i32_1 : i32, i32, i32, i32
  }
  func.func @transform_1(%arg0: i32) -> (i32, i32) {
    %c0_i32 = arith.constant 0 : i32
    %c0_i32_0 = arith.constant 0 : i32
    %c0_i32_1 = arith.constant 0 : i32
    return %c0_i32, %c0_i32_0 : i32, i32
  }
  func.func @transform_2(%arg0: i32) -> (i32, i32) {
    %c0_i32 = arith.constant 0 : i32
    %c0_i32_0 = arith.constant 0 : i32
    %c0_i32_1 = arith.constant 0 : i32
    return %c0_i32, %c0_i32_0 : i32, i32
  }
  func.func @transform_3(%arg0: i32) -> (i32, i32) {
    %c0_i32 = arith.constant 0 : i32
    %c0_i32_0 = arith.constant 0 : i32
    %c0_i32_1 = arith.constant 0 : i32
    return %c0_i32, %c0_i32_0 : i32, i32
  }
  func.func @transform_4(%arg0: i32) -> (i32, i32) {
    %c0_i32 = arith.constant 0 : i32
    %c0_i32_0 = arith.constant 0 : i32
    %c0_i32_1 = arith.constant 0 : i32
    return %c0_i32, %c0_i32_0 : i32, i32
  }
  func.func @transform_5(%arg0: i32) -> (i32, i32) {
    %c0_i32 = arith.constant 0 : i32
    %c0_i32_0 = arith.constant 0 : i32
    %c0_i32_1 = arith.constant 0 : i32
    return %c0_i32, %c0_i32_0 : i32, i32
  }
  func.func @transform_6(%arg0: i32) -> (i32, i32) {
    %c0_i32 = arith.constant 0 : i32
    %c0_i32_0 = arith.constant 0 : i32
    %c0_i32_1 = arith.constant 0 : i32
    return %c0_i32, %c0_i32_0 : i32, i32
  }
  func.func @transform_7(%arg0: i32) -> (i32, i32, i32, i32) {
    %c0_i32 = arith.constant 0 : i32
    %c0_i32_0 = arith.constant 0 : i32
    %c0_i32_1 = arith.constant 0 : i32
    %c0_i32_2 = arith.constant 0 : i32
    return %arg0, %c0_i32, %c0_i32_0, %c0_i32_1 : i32, i32, i32, i32
  }
}

</mosaic_0001>

<llo_original>
// kernel: tpu_custom_call.1
$region0: #{tpu_custom_call.1}
  #allocation0 [shape = 'u32[]', space=smem, size = 0x4, offset = 0x4, fixed_abs, tag = 'smem constant byte address 0x4 - core index']
  #allocation1 [shape = 'u32[72,128]{1,0:T(1,128)}', space=vmem, size = 0x9000, scoped, tag = 'internal scratch']
  #allocation2 [shape = 'f32[18,18,24]{2,1,0:T(8,128)}', space=vmem, size = 0x36000, scoped, tag = 'scratch operand']
  %s0 = inlined_call_operand.vmem [shape: f32[2,16,16,4], index: 0, kind: input, shape index: {}]
  %s1 = inlined_call_operand.vmem [shape: f32[4,24], index: 1, kind: input, shape index: {}]
  %s2 = inlined_call_operand.vmem [shape: f32[1,24], index: 2, kind: input, shape index: {}]
  %s3 = inlined_call_operand.vmem [shape: f32[9,24], index: 3, kind: input, shape index: {}]
  %s4 = inlined_call_operand.vmem [shape: f32[1,24], index: 4, kind: input, shape index: {}]
  %s5 = inlined_call_operand.vmem [shape: f32[24,4], index: 5, kind: input, shape index: {}]
  %s6 = inlined_call_operand.vmem [shape: f32[1,4], index: 6, kind: input, shape index: {}]
  %s7 = inlined_call_operand.vmem [shape: f32[2,16,16,4], index: 7, kind: output, shape index: {}]
  %s8 = sld [smem:[#allocation0]]
  $region61: #{tpu_custom_call.1} parent=0
    _
  %s10 = ssub.s32 1, %s8
  %s11 = scalar_select 0, %s10, %s8
  loop: start=0, step=1, limit=4
  $region2: #{tpu_custom_call.1} parent=0 // loop_pre_header
    _
  $region3: #{tpu_custom_call.1} parent=0 // loop_header
    %s13 = sphi 0, %s17
    %p14 = scmp.ge.s32.totalorder %s13, 4
    %s23 = sphi 0, %s25
    %s26 = sphi 0, %s23
    %s27 = sphi 0, %s26
    %s43 = sphi 0, %s27
    %s47 = sphi 0, %s47
    %s49 = sphi 0, %s47
    %s50 = sphi 0, %s49
    %s64 = sphi 0, %s50
    %s68 = sphi 0, %s68
    %s70 = sphi 0, %s68
    %s71 = sphi 0, %s70
    %s85 = sphi 0, %s71
    %s89 = sphi 0, %s89
    %s91 = sphi 0, %s89
    %s92 = sphi 0, %s91
    %s106 = sphi 0, %s92
    %s110 = sphi 0, %s110
    %s112 = sphi 0, %s110
    %s113 = sphi 0, %s112
    %s127 = sphi 0, %s113
    %s131 = sphi 0, %s131
    %s133 = sphi 0, %s131
    %s134 = sphi 0, %s133
    %s148 = sphi 0, %s134
    %s152 = sphi 0, %s152
    %s154 = sphi 0, %s152
    %s155 = sphi 0, %s154
    %s169 = sphi 0, %s155
    %s175 = sphi 0, %s177
    %s178 = sphi 0, %s175
    %s179 = sphi 0, %s178
    %s195 = sphi 0, %s179
  $region4: #{tpu_custom_call.1} parent=0 // loop_header_branch
    %16 = sbr.rel (%p14) target = $region8
  $region5: #{tpu_custom_call.1} parent=0 // loop_body
    %s18 = ssub.s32 %s13, 1
    %s19 = ssub.s32 %s13, 2
    %s20 = sadd.s32 %s13, 1
    %s21 = ssub.s32 %s13, %s20
    %p22 = scmp.eq.s32.totalorder %s21, 0
    %s24 = sadd.s32 %s23, 1
    %s25 = scalar_select %p22, %s23, %s24
    %p28 = pneg %p22
    %p29 = scmp.eq.s32.totalorder %s13, 1
    %p30 = por %p28, %p29
    %p31 = scmp.ne.s32.totalorder %s23, %s26
    %p32 = scmp.eq.s32.totalorder %s13, 0
    %p33 = por %p31, %p32
    %p34 = scmp.ne.s32.totalorder %s23, %s26
    %p35 = scmp.eq.s32.totalorder %s18, 1
    %p36 = por %p34, %p35
    %p37 = scmp.ne.s32.totalorder %s26, %s27
    %p38 = scmp.eq.s32.totalorder %s18, 0
    %p39 = por %p37, %p38
    %p40 = scmp.ne.s32.totalorder %s26, %s27
    %p41 = scmp.eq.s32.totalorder %s19, 1
    %p42 = por %p40, %p41
    %p44 = scmp.ne.s32.totalorder %s27, %s43
    %p45 = scmp.eq.s32.totalorder %s19, 0
    %p46 = por %p44, %p45
    %s48 = sadd.s32 %s47, 1
    %p51 = scmp.eq.s32.totalorder %s13, 1
    %p52 = scmp.ne.s32.totalorder %s47, %s49
    %p53 = scmp.eq.s32.totalorder %s13, 0
    %p54 = por %p52, %p53
    %p55 = scmp.ne.s32.totalorder %s47, %s49
    %p56 = scmp.eq.s32.totalorder %s18, 1
    %p57 = por %p55, %p56
    %p58 = scmp.ne.s32.totalorder %s49, %s50
    %p59 = scmp.eq.s32.totalorder %s18, 0
    %p60 = por %p58, %p59
    %p61 = scmp.ne.s32.totalorder %s49, %s50
    %p62 = scmp.eq.s32.totalorder %s19, 1
    %p63 = por %p61, %p62
    %p65 = scmp.ne.s32.totalorder %s50, %s64
    %p66 = scmp.eq.s32.totalorder %s19, 0
    %p67 = por %p65, %p66
    %s69 = sadd.s32 %s68, 1
    %p72 = scmp.eq.s32.totalorder %s13, 1
    %p73 = scmp.ne.s32.totalorder %s68, %s70
    %p74 = scmp.eq.s32.totalorder %s13, 0
    %p75 = por %p73, %p74
    %p76 = scmp.ne.s32.totalorder %s68, %s70
    %p77 = scmp.eq.s32.totalorder %s18, 1
    %p78 = por %p76, %p77
    %p79 = scmp.ne.s32.totalorder %s70, %s71
    %p80 = scmp.eq.s32.totalorder %s18, 0
    %p81 = por %p79, %p80
    %p82 = scmp.ne.s32.totalorder %s70, %s71
    %p83 = scmp.eq.s32.totalorder %s19, 1
    %p84 = por %p82, %p83
    %p86 = scmp.ne.s32.totalorder %s71, %s85
    %p87 = scmp.eq.s32.totalorder %s19, 0
    %p88 = por %p86, %p87
    %s90 = sadd.s32 %s89, 1
    %p93 = scmp.eq.s32.totalorder %s13, 1
    %p94 = scmp.ne.s32.totalorder %s89, %s91
    %p95 = scmp.eq.s32.totalorder %s13, 0
    %p96 = por %p94, %p95
    %p97 = scmp.ne.s32.totalorder %s89, %s91
    %p98 = scmp.eq.s32.totalorder %s18, 1
    %p99 = por %p97, %p98
    %p100 = scmp.ne.s32.totalorder %s91, %s92
    %p101 = scmp.eq.s32.totalorder %s18, 0
    %p102 = por %p100, %p101
    %p103 = scmp.ne.s32.totalorder %s91, %s92
    %p104 = scmp.eq.s32.totalorder %s19, 1
    %p105 = por %p103, %p104
    %p107 = scmp.ne.s32.totalorder %s92, %s106
    %p108 = scmp.eq.s32.totalorder %s19, 0
    %p109 = por %p107, %p108
    %s111 = sadd.s32 %s110, 1
    %p114 = scmp.eq.s32.totalorder %s13, 1
    %p115 = scmp.ne.s32.totalorder %s110, %s112
    %p116 = scmp.eq.s32.totalorder %s13, 0
    %p117 = por %p115, %p116
    %p118 = scmp.ne.s32.totalorder %s110, %s112
    %p119 = scmp.eq.s32.totalorder %s18, 1
    %p120 = por %p118, %p119
    %p121 = scmp.ne.s32.totalorder %s112, %s113
    %p122 = scmp.eq.s32.totalorder %s18, 0
    %p123 = por %p121, %p122
    %p124 = scmp.ne.s32.totalorder %s112, %s113
    %p125 = scmp.eq.s32.totalorder %s19, 1
    %p126 = por %p124, %p125
    %p128 = scmp.ne.s32.totalorder %s113, %s127
    %p129 = scmp.eq.s32.totalorder %s19, 0
    %p130 = por %p128, %p129
    %s132 = sadd.s32 %s131, 1
    %p135 = scmp.eq.s32.totalorder %s13, 1
    %p136 = scmp.ne.s32.totalorder %s131, %s133
    %p137 = scmp.eq.s32.totalorder %s13, 0
    %p138 = por %p136, %p137
    %p139 = scmp.ne.s32.totalorder %s131, %s133
    %p140 = scmp.eq.s32.totalorder %s18, 1
    %p141 = por %p139, %p140
    %p142 = scmp.ne.s32.totalorder %s133, %s134
    %p143 = scmp.eq.s32.totalorder %s18, 0
    %p144 = por %p142, %p143
    %p145 = scmp.ne.s32.totalorder %s133, %s134
    %p146 = scmp.eq.s32.totalorder %s19, 1
    %p147 = por %p145, %p146
    %p149 = scmp.ne.s32.totalorder %s134, %s148
    %p150 = scmp.eq.s32.totalorder %s19, 0
    %p151 = por %p149, %p150
    %s153 = sadd.s32 %s152, 1
    %p156 = scmp.eq.s32.totalorder %s13, 1
    %p157 = scmp.ne.s32.totalorder %s152, %s154
    %p158 = scmp.eq.s32.totalorder %s13, 0
    %p159 = por %p157, %p158
    %p160 = scmp.ne.s32.totalorder %s152, %s154
    %p161 = scmp.eq.s32.totalorder %s18, 1
    %p162 = por %p160, %p161
    %p163 = scmp.ne.s32.totalorder %s154, %s155
    %p164 = scmp.eq.s32.totalorder %s18, 0
    %p165 = por %p163, %p164
    %p166 = scmp.ne.s32.totalorder %s154, %s155
    %p167 = scmp.eq.s32.totalorder %s19, 1
    %p168 = por %p166, %p167
    %p170 = scmp.ne.s32.totalorder %s155, %s169
    %p171 = scmp.eq.s32.totalorder %s19, 0
    %p172 = por %p170, %p171
    %s173 = ssub.s32 %s13, %s20
    %p174 = scmp.eq.s32.totalorder %s173, 0
    %s176 = sadd.s32 %s175, 1
    %s177 = scalar_select %p174, %s175, %s176
    %p180 = pneg %p174
    %p181 = scmp.eq.s32.totalorder %s13, 1
    %p182 = por %p180, %p181
    %p183 = scmp.ne.s32.totalorder %s175, %s178
    %p184 = scmp.eq.s32.totalorder %s13, 0
    %p185 = por %p183, %p184
    %p186 = scmp.ne.s32.totalorder %s175, %s178
    %p187 = scmp.eq.s32.totalorder %s18, 1
    %p188 = por %p186, %p187
    %p189 = scmp.ne.s32.totalorder %s178, %s179
    %p190 = scmp.eq.s32.totalorder %s18, 0
    %p191 = por %p189, %p190
    %p192 = scmp.ne.s32.totalorder %s178, %s179
    %p193 = scmp.eq.s32.totalorder %s19, 1
    %p194 = por %p192, %p193
    %p196 = scmp.ne.s32.totalorder %s179, %s195
    %p197 = scmp.eq.s32.totalorder %s19, 0
    %p198 = por %p196, %p197
    %p199 = scmp.le.s32.totalorder 1, %s13
    %p200 = scmp.lt.s32.totalorder %s13, 3
    %p201 = pnand %p199, %p200
    %p202 = pneg %p201
    // Predicated region
    $region9: #{tpu_custom_call.1} parent=5 // pred_check
      _
    $region10: #{tpu_custom_call.1} parent=5 // pred_check_branch
      %204 = sbr.rel (%p201) target = $region12
    $region11: #{tpu_custom_call.1} parent=5 // pred_region
      %s205 = ssub.s32 %s13, 1
      // Predicated region
      $region13: #{tpu_custom_call.1} parent=11 // pred_check
        %p206 = pneg %p60
      $region14: #{tpu_custom_call.1} parent=11 // pred_check_branch
        %208 = sbr.rel (%p206) target = $region16
      $region15: #{tpu_custom_call.1} parent=11 // pred_region
        _
      $region16: #{tpu_custom_call.1} parent=11 // pred_fallthru
        _
      // Predicated region
      $region17: #{tpu_custom_call.1} parent=11 // pred_check
        %p209 = pneg %p81
      $region18: #{tpu_custom_call.1} parent=11 // pred_check_branch
        %211 = sbr.rel (%p209) target = $region20
      $region19: #{tpu_custom_call.1} parent=11 // pred_region
        _
      $region20: #{tpu_custom_call.1} parent=11 // pred_fallthru
        _
      // Predicated region
      $region21: #{tpu_custom_call.1} parent=11 // pred_check
        %p212 = pneg %p102
      $region22: #{tpu_custom_call.1} parent=11 // pred_check_branch
        %214 = sbr.rel (%p212) target = $region24
      $region23: #{tpu_custom_call.1} parent=11 // pred_region
        _
      $region24: #{tpu_custom_call.1} parent=11 // pred_fallthru
        _
      // Predicated region
      $region25: #{tpu_custom_call.1} parent=11 // pred_check
        %p215 = pneg %p123
      $region26: #{tpu_custom_call.1} parent=11 // pred_check_branch
        %217 = sbr.rel (%p215) target = $region28
      $region27: #{tpu_custom_call.1} parent=11 // pred_region
        _
      $region28: #{tpu_custom_call.1} parent=11 // pred_fallthru
        _
      // Predicated region
      $region29: #{tpu_custom_call.1} parent=11 // pred_check
        %p218 = pneg %p144
      $region30: #{tpu_custom_call.1} parent=11 // pred_check_branch
        %220 = sbr.rel (%p218) target = $region32
      $region31: #{tpu_custom_call.1} parent=11 // pred_region
        _
      $region32: #{tpu_custom_call.1} parent=11 // pred_fallthru
        _
      // Predicated region
      $region33: #{tpu_custom_call.1} parent=11 // pred_check
        %p221 = pneg %p165
      $region34: #{tpu_custom_call.1} parent=11 // pred_check_branch
        %223 = sbr.rel (%p221) target = $region36
      $region35: #{tpu_custom_call.1} parent=11 // pred_region
        _
      $region36: #{tpu_custom_call.1} parent=11 // pred_fallthru
        _
    $region12: #{tpu_custom_call.1} parent=5 // pred_fallthru
      _
    %p224 = scmp.lt.s32.totalorder %s13, 2
    // Predicated region
    $region37: #{tpu_custom_call.1} parent=5 // pred_check
      %p225 = pneg %p224
    $region38: #{tpu_custom_call.1} parent=5 // pred_check_branch
      %227 = sbr.rel (%p225) target = $region40
    $region39: #{tpu_custom_call.1} parent=5 // pred_region
      // Predicated region
      $region41: #{tpu_custom_call.1} parent=39 // pred_check
        %p228 = pneg %p33
      $region42: #{tpu_custom_call.1} parent=39 // pred_check_branch
        %230 = sbr.rel (%p228) target = $region44
      $region43: #{tpu_custom_call.1} parent=39 // pred_region
        %p231 = scmp.lt.s32.totalorder %s13, 1
        %s232 = scalar_select %p231, %s13, 1
        %s233 = smul.addr %s232, 32
        %s234 = smul.addr %s233, 8
        %s235 = scalar_lea.vmem %s0, %s234
      $region44: #{tpu_custom_call.1} parent=39 // pred_fallthru
        _
    $region40: #{tpu_custom_call.1} parent=5 // pred_fallthru
      _
    %p236 = scmp.le.s32.totalorder 1, %s13
    %p237 = scmp.lt.s32.totalorder %s13, 3
    %p238 = pnand %p236, %p237
    %p239 = pneg %p238
    // Predicated region
    $region45: #{tpu_custom_call.1} parent=5 // pred_check
      _
    $region46: #{tpu_custom_call.1} parent=5 // pred_check_branch
      %241 = sbr.rel (%p238) target = $region48
    $region47: #{tpu_custom_call.1} parent=5 // pred_region
      %s242 = ssub.s32 %s13, 1
      %p243 = scmp.lt.s32.totalorder %s18, 1
      %s244 = scalar_select %p243, %s18, 1
      %s245 = smul.addr %s244, 32
      %s246 = smul.addr %s245, 8
      %s247 = scalar_lea.vmem %s0, %s246
      %p248 = pneg %p39
      %p249 = pneg %p36
      %p250 = pneg %p60
      %p251 = pneg %p57
      %p252 = pneg %p81
      %p253 = pneg %p78
      %p254 = pneg %p102
      %p255 = pneg %p99
      %p256 = pneg %p123
      %p257 = pneg %p120
      %p258 = pneg %p144
      %p259 = pneg %p141
      %p260 = pneg %p165
      %p261 = pneg %p162
      %p262 = pneg %p191
      %p263 = pneg %p188
      %p264 = scmp.lt.s32.totalorder %s18, 1
      %s265 = scalar_select %p264, %s18, 1
      %s266 = smul.addr %s265, 32
      %s267 = smul.addr %s266, 8
      %s268 = scalar_lea.vmem %s7, %s267
      %p269 = scmp.lt.s32.totalorder %s18, 1
      %s270 = scalar_select %p269, %s18, 1
      %s271 = smul.addr %s270, 32
      %s272 = smul.addr %s271, 8
      %s273 = scalar_lea.vmem %s0, %s272
      %p274 = scmp.lt.s32.totalorder %s18, 1
      %s275 = scalar_select %p274, %s18, 1
      %s276 = smul.addr %s275, 32
      %s277 = smul.addr %s276, 8
      %s278 = scalar_lea.vmem %s7, %s277
      %v279 = vld [vmem:[%s273] sm:$0xff]
      %v280 = vld [vmem:[%s273 + $0x8] sm:$0xff]
      %v281 = vld [vmem:[%s273 + $0x10] sm:$0xff]
      %v282 = vld [vmem:[%s273 + $0x18] sm:$0xff]
      %v283 = vld [vmem:[%s273 + $0x20] sm:$0xff]
      %v284 = vld [vmem:[%s273 + $0x28] sm:$0xff]
      %v285 = vld [vmem:[%s273 + $0x30] sm:$0xff]
      %v286 = vld [vmem:[%s273 + $0x38] sm:$0xff]
      %v287 = vld [vmem:[%s273 + $0x40] sm:$0xff]
      %v288 = vld [vmem:[%s273 + $0x48] sm:$0xff]
      %v289 = vld [vmem:[%s273 + $0x50] sm:$0xff]
      %v290 = vld [vmem:[%s273 + $0x58] sm:$0xff]
      %v291 = vld [vmem:[%s273 + $0x60] sm:$0xff]
      %v292 = vld [vmem:[%s273 + $0x68] sm:$0xff]
      %v293 = vld [vmem:[%s273 + $0x70] sm:$0xff]
      %v294 = vld [vmem:[%s273 + $0x78] sm:$0xff]
      %v295 = vld [vmem:[%s273 + $0x80] sm:$0xff]
      %v296 = vld [vmem:[%s273 + $0x88] sm:$0xff]
      %v297 = vld [vmem:[%s273 + $0x90] sm:$0xff]
      %v298 = vld [vmem:[%s273 + $0x98] sm:$0xff]
      %v299 = vld [vmem:[%s273 + $0xa0] sm:$0xff]
      %v300 = vld [vmem:[%s273 + $0xa8] sm:$0xff]
      %v301 = vld [vmem:[%s273 + $0xb0] sm:$0xff]
      %v302 = vld [vmem:[%s273 + $0xb8] sm:$0xff]
      %v303 = vld [vmem:[%s273 + $0xc0] sm:$0xff]
      %v304 = vld [vmem:[%s273 + $0xc8] sm:$0xff]
      %v305 = vld [vmem:[%s273 + $0xd0] sm:$0xff]
      %v306 = vld [vmem:[%s273 + $0xd8] sm:$0xff]
      %v307 = vld [vmem:[%s273 + $0xe0] sm:$0xff]
      %v308 = vld [vmem:[%s273 + $0xe8] sm:$0xff]
      %v309 = vld [vmem:[%s273 + $0xf0] sm:$0xff]
      %v310 = vld [vmem:[%s273 + $0xf8] sm:$0xff]
      %v311 = vld [vmem:[%s1] sm:$0xf]
      %v312 = vld [vmem:[%s2] sm:$0x1]
      %v314 = vperm.slane %v312, 0
      %vm316 = vcmask 31744
      %v318 = vsel %vm316, %v279, 0
      %v321 = vsel %vm316, %v280, 0
      %v324 = vsel %vm316, %v281, 0
      %v327 = vsel %vm316, %v282, 0
      %v330 = vsel %vm316, %v283, 0
      %v333 = vsel %vm316, %v284, 0
      %v336 = vsel %vm316, %v285, 0
      %v339 = vsel %vm316, %v286, 0
      %v342 = vsel %vm316, %v287, 0
      %v345 = vsel %vm316, %v288, 0
      %v348 = vsel %vm316, %v289, 0
      %v351 = vsel %vm316, %v290, 0
      %v354 = vsel %vm316, %v291, 0
      %v357 = vsel %vm316, %v292, 0
      %v360 = vsel %vm316, %v293, 0
      %v363 = vsel %vm316, %v294, 0
      %v366 = vsel %vm316, %v295, 0
      %v369 = vsel %vm316, %v296, 0
      %v372 = vsel %vm316, %v297, 0
      %v375 = vsel %vm316, %v298, 0
      %v378 = vsel %vm316, %v299, 0
      %v381 = vsel %vm316, %v300, 0
      %v384 = vsel %vm316, %v301, 0
      %v387 = vsel %vm316, %v302, 0
      %v390 = vsel %vm316, %v303, 0
      %v393 = vsel %vm316, %v304, 0
      %v396 = vsel %vm316, %v305, 0
      %v399 = vsel %vm316, %v306, 0
      %v402 = vsel %vm316, %v307, 0
      %v405 = vsel %vm316, %v308, 0
      %v408 = vsel %vm316, %v309, 0
      %v411 = vsel %vm316, %v310, 0
      %vm413 = vcmask 1043456
      %v415 = vsel %vm413, %v311, 0
      %417 = vmatpush.msra.mxu0 0.0
      %418 = vmatpush.msra.mxu0 0.0
      %419 = vmatpush.msra.mxu0 0.0
      %420 = vmatpush.msra.mxu0 0.0
      %421 = vmatpush.msra.mxu0 0.0
      %422 = vmatpush.msra.mxu0 0.0
      %423 = vmatpush.msra.mxu0 0.0
      %424 = vmatpush.msra.mxu0 0.0
      %425 = vmatpush.msra.mxu0 0.0
      %426 = vmatpush.msra.mxu0 0.0
      %427 = vmatpush.msra.mxu0 0.0
      %428 = vmatpush.msra.mxu0 0.0
      %429 = vmatpush.msra.mxu0 0.0
      %430 = vmatpush.msra.mxu0 0.0
      %431 = vmatpush.msra.mxu0 0.0
      %432 = vmatpush.msra.mxu0 %v415
      %433 = vmatmul.f32.gmra.mxu0 %v318
      %v434 = vpop.f32.mrf.mxu0
      %v435 = vadd.f32 %v314, %v434
      %436 = vmatmul.f32.gmra.mxu0 %v321
      %v437 = vpop.f32.mrf.mxu0
      %v438 = vadd.f32 %v314, %v437
      %439 = vmatmul.f32.gmra.mxu0 %v324
      %v440 = vpop.f32.mrf.mxu0
      %v441 = vadd.f32 %v314, %v440
      %442 = vmatmul.f32.gmra.mxu0 %v327
      %v443 = vpop.f32.mrf.mxu0
      %v444 = vadd.f32 %v314, %v443
      %445 = vmatmul.f32.gmra.mxu0 %v330
      %v446 = vpop.f32.mrf.mxu0
      %v447 = vadd.f32 %v314, %v446
      %448 = vmatmul.f32.gmra.mxu0 %v333
      %v449 = vpop.f32.mrf.mxu0
      %v450 = vadd.f32 %v314, %v449
      %451 = vmatmul.f32.gmra.mxu0 %v336
      %v452 = vpop.f32.mrf.mxu0
      %v453 = vadd.f32 %v314, %v452
      %454 = vmatmul.f32.gmra.mxu0 %v339
      %v455 = vpop.f32.mrf.mxu0
      %v456 = vadd.f32 %v314, %v455
      %457 = vmatmul.f32.gmra.mxu0 %v342
      %v458 = vpop.f32.mrf.mxu0
      %v459 = vadd.f32 %v314, %v458
      %460 = vmatmul.f32.gmra.mxu0 %v345
      %v461 = vpop.f32.mrf.mxu0
      %v462 = vadd.f32 %v314, %v461
      %463 = vmatmul.f32.gmra.mxu0 %v348
      %v464 = vpop.f32.mrf.mxu0
      %v465 = vadd.f32 %v314, %v464
      %466 = vmatmul.f32.gmra.mxu0 %v351
      %v467 = vpop.f32.mrf.mxu0
      %v468 = vadd.f32 %v314, %v467
      %469 = vmatmul.f32.gmra.mxu0 %v354
      %v470 = vpop.f32.mrf.mxu0
      %v471 = vadd.f32 %v314, %v470
      %472 = vmatmul.f32.gmra.mxu0 %v357
      %v473 = vpop.f32.mrf.mxu0
      %v474 = vadd.f32 %v314, %v473
      %475 = vmatmul.f32.gmra.mxu0 %v360
      %v476 = vpop.f32.mrf.mxu0
      %v477 = vadd.f32 %v314, %v476
      %478 = vmatmul.f32.gmra.mxu0 %v363
      %v479 = vpop.f32.mrf.mxu0
      %v480 = vadd.f32 %v314, %v479
      %481 = vmatmul.f32.gmra.mxu0 %v366
      %v482 = vpop.f32.mrf.mxu0
      %v483 = vadd.f32 %v314, %v482
      %484 = vmatmul.f32.gmra.mxu0 %v369
      %v485 = vpop.f32.mrf.mxu0
      %v486 = vadd.f32 %v314, %v485
      %487 = vmatmul.f32.gmra.mxu0 %v372
      %v488 = vpop.f32.mrf.mxu0
      %v489 = vadd.f32 %v314, %v488
      %490 = vmatmul.f32.gmra.mxu0 %v375
      %v491 = vpop.f32.mrf.mxu0
      %v492 = vadd.f32 %v314, %v491
      %493 = vmatmul.f32.gmra.mxu0 %v378
      %v494 = vpop.f32.mrf.mxu0
      %v495 = vadd.f32 %v314, %v494
      %496 = vmatmul.f32.gmra.mxu0 %v381
      %v497 = vpop.f32.mrf.mxu0
      %v498 = vadd.f32 %v314, %v497
      %499 = vmatmul.f32.gmra.mxu0 %v384
      %v500 = vpop.f32.mrf.mxu0
      %v501 = vadd.f32 %v314, %v500
      %502 = vmatmul.f32.gmra.mxu0 %v387
      %v503 = vpop.f32.mrf.mxu0
      %v504 = vadd.f32 %v314, %v503
      %505 = vmatmul.f32.gmra.mxu0 %v390
      %v506 = vpop.f32.mrf.mxu0
      %v507 = vadd.f32 %v314, %v506
      %508 = vmatmul.f32.gmra.mxu0 %v393
      %v509 = vpop.f32.mrf.mxu0
      %v510 = vadd.f32 %v314, %v509
      %511 = vmatmul.f32.gmra.mxu0 %v396
      %v512 = vpop.f32.mrf.mxu0
      %v513 = vadd.f32 %v314, %v512
      %514 = vmatmul.f32.gmra.mxu0 %v399
      %v515 = vpop.f32.mrf.mxu0
      %v516 = vadd.f32 %v314, %v515
      %517 = vmatmul.f32.gmra.mxu0 %v402
      %v518 = vpop.f32.mrf.mxu0
      %v519 = vadd.f32 %v314, %v518
      %520 = vmatmul.f32.gmra.mxu0 %v405
      %v521 = vpop.f32.mrf.mxu0
      %v522 = vadd.f32 %v314, %v521
      %523 = vmatmul.f32.gmra.mxu0 %v408
      %v524 = vpop.f32.mrf.mxu0
      %v525 = vadd.f32 %v314, %v524
      %526 = vmatmul.f32.gmra.mxu0 %v411
      %v527 = vpop.f32.mrf.mxu0
      %v528 = vadd.f32 %v314, %v527
      %529 = vdwg.mxu0
      %v530 = vmax.f32 %v435, 0.0
      %v531 = vmax.f32 %v438, 0.0
      %v532 = vmax.f32 %v441, 0.0
      %v533 = vmax.f32 %v444, 0.0
      %v534 = vmax.f32 %v447, 0.0
      %v535 = vmax.f32 %v450, 0.0
      %v536 = vmax.f32 %v453, 0.0
      %v537 = vmax.f32 %v456, 0.0
      %v538 = vmax.f32 %v459, 0.0
      %v539 = vmax.f32 %v462, 0.0
      %v540 = vmax.f32 %v465, 0.0
      %v541 = vmax.f32 %v468, 0.0
      %v542 = vmax.f32 %v471, 0.0
      %v543 = vmax.f32 %v474, 0.0
      %v544 = vmax.f32 %v477, 0.0
      %v545 = vmax.f32 %v480, 0.0
      %v546 = vmax.f32 %v483, 0.0
      %v547 = vmax.f32 %v486, 0.0
      %v548 = vmax.f32 %v489, 0.0
      %v549 = vmax.f32 %v492, 0.0
      %v550 = vmax.f32 %v495, 0.0
      %v551 = vmax.f32 %v498, 0.0
      %v552 = vmax.f32 %v501, 0.0
      %v553 = vmax.f32 %v504, 0.0
      %v554 = vmax.f32 %v507, 0.0
      %v555 = vmax.f32 %v510, 0.0
      %v556 = vmax.f32 %v513, 0.0
      %v557 = vmax.f32 %v516, 0.0
      %v558 = vmax.f32 %v519, 0.0
      %v559 = vmax.f32 %v522, 0.0
      %v560 = vmax.f32 %v525, 0.0
      %v561 = vmax.f32 %v528, 0.0
      %v562 = vld [vmem:[%s3] sm:$0xff]
      %v563 = vld [vmem:[%s3 + $0x8] sm:$0x1]
      %vm564 = vcmask 195584
      %565 = vst.msk [vmem:[#allocation2] sm:$0xff] %vm564, 0.0
      %566 = vst.msk [vmem:[#allocation2 + $0x8] sm:$0xff] %vm564, 0.0
      %vm567 = vcmask 189440
      %568 = vst.msk [vmem:[#allocation2 + $0x10] sm:$0x3] %vm567, 0.0
      %s569 = scalar_lea.vmem [#allocation2], 408
      %570 = vst.msk [vmem:[%s569] sm:$0xff] %vm564, 0.0
      %571 = vst.msk [vmem:[%s569 + $0x8] sm:$0xff] %vm564, 0.0
      %572 = vst.msk [vmem:[%s569 + $0x10] sm:$0x3] %vm567, 0.0
      %vm573 = vcmask 188416
      %574 = vst.msk [vmem:[#allocation2] sm:$0x1] %vm573, 0.0
      %575 = vst.msk [vmem:[#allocation2 + $0x18] sm:$0x1] %vm573, 0.0
      %576 = vst.msk [vmem:[#allocation2 + $0x30] sm:$0x1] %vm573, 0.0
      %577 = vst.msk [vmem:[#allocation2 + $0x48] sm:$0x1] %vm573, 0.0
      %578 = vst.msk [vmem:[#allocation2 + $0x60] sm:$0x1] %vm573, 0.0
      %579 = vst.msk [vmem:[#allocation2 + $0x78] sm:$0x1] %vm573, 0.0
      %580 = vst.msk [vmem:[#allocation2 + $0x90] sm:$0x1] %vm573, 0.0
      %581 = vst.msk [vmem:[#allocation2 + $0xa8] sm:$0x1] %vm573, 0.0
      %582 = vst.msk [vmem:[#allocation2 + $0xc0] sm:$0x1] %vm573, 0.0
      %583 = vst.msk [vmem:[#allocation2 + $0xd8] sm:$0x1] %vm573, 0.0
      %584 = vst.msk [vmem:[#allocation2 + $0xf0] sm:$0x1] %vm573, 0.0
      %585 = vst.msk [vmem:[#allocation2 + $0x108] sm:$0x1] %vm573, 0.0
      %586 = vst.msk [vmem:[#allocation2 + $0x120] sm:$0x1] %vm573, 0.0
      %587 = vst.msk [vmem:[#allocation2 + $0x138] sm:$0x1] %vm573, 0.0
      %588 = vst.msk [vmem:[#allocation2 + $0x150] sm:$0x1] %vm573, 0.0
      %589 = vst.msk [vmem:[#allocation2 + $0x168] sm:$0x1] %vm573, 0.0
      %590 = vst.msk [vmem:[#allocation2 + $0x180] sm:$0x1] %vm573, 0.0
      %591 = vst.msk [vmem:[#allocation2 + $0x198] sm:$0x1] %vm573, 0.0
      %592 = vst.msk [vmem:[#allocation2 + $0x11] sm:$0x1] %vm573, 0.0
      %593 = vst.msk [vmem:[#allocation2 + $0x29] sm:$0x1] %vm573, 0.0
      %594 = vst.msk [vmem:[#allocation2 + $0x41] sm:$0x1] %vm573, 0.0
      %595 = vst.msk [vmem:[#allocation2 + $0x59] sm:$0x1] %vm573, 0.0
      %596 = vst.msk [vmem:[#allocation2 + $0x71] sm:$0x1] %vm573, 0.0
      %597 = vst.msk [vmem:[#allocation2 + $0x89] sm:$0x1] %vm573, 0.0
      %598 = vst.msk [vmem:[#allocation2 + $0xa1] sm:$0x1] %vm573, 0.0
      %599 = vst.msk [vmem:[#allocation2 + $0xb9] sm:$0x1] %vm573, 0.0
      %600 = vst.msk [vmem:[#allocation2 + $0xd1] sm:$0x1] %vm573, 0.0
      %601 = vst.msk [vmem:[#allocation2 + $0xe9] sm:$0x1] %vm573, 0.0
      %602 = vst.msk [vmem:[#allocation2 + $0x101] sm:$0x1] %vm573, 0.0
      %603 = vst.msk [vmem:[#allocation2 + $0x119] sm:$0x1] %vm573, 0.0
      %604 = vst.msk [vmem:[#allocation2 + $0x131] sm:$0x1] %vm573, 0.0
      %605 = vst.msk [vmem:[#allocation2 + $0x149] sm:$0x1] %vm573, 0.0
      %606 = vst.msk [vmem:[#allocation2 + $0x161] sm:$0x1] %vm573, 0.0
      %607 = vst.msk [vmem:[#allocation2 + $0x179] sm:$0x1] %vm573, 0.0
      %608 = vst.msk [vmem:[#allocation2 + $0x191] sm:$0x1] %vm573, 0.0
      %609 = vst.msk [vmem:[#allocation2 + $0x1a9] sm:$0x1] %vm573, 0.0
      %s610 = scalar_lea.vmem [#allocation2], 24
      %611 = vst.msk [vmem:[%s610 + $0x1] sm:$0xff] %vm564, %v530
      %612 = vst.msk [vmem:[%s610 + $0x9] sm:$0xff] %vm564, %v531
      %613 = vst.msk [vmem:[%s610 + $0x19] sm:$0xff] %vm564, %v532
      %614 = vst.msk [vmem:[%s610 + $0x21] sm:$0xff] %vm564, %v533
      %615 = vst.msk [vmem:[%s610 + $0x31] sm:$0xff] %vm564, %v534
      %616 = vst.msk [vmem:[%s610 + $0x39] sm:$0xff] %vm564, %v535
      %617 = vst.msk [vmem:[%s610 + $0x49] sm:$0xff] %vm564, %v536
      %618 = vst.msk [vmem:[%s610 + $0x51] sm:$0xff] %vm564, %v537
      %619 = vst.msk [vmem:[%s610 + $0x61] sm:$0xff] %vm564, %v538
      %620 = vst.msk [vmem:[%s610 + $0x69] sm:$0xff] %vm564, %v539
      %621 = vst.msk [vmem:[%s610 + $0x79] sm:$0xff] %vm564, %v540
      %622 = vst.msk [vmem:[%s610 + $0x81] sm:$0xff] %vm564, %v541
      %623 = vst.msk [vmem:[%s610 + $0x91] sm:$0xff] %vm564, %v542
      %624 = vst.msk [vmem:[%s610 + $0x99] sm:$0xff] %vm564, %v543
      %625 = vst.msk [vmem:[%s610 + $0xa9] sm:$0xff] %vm564, %v544
      %626 = vst.msk [vmem:[%s610 + $0xb1] sm:$0xff] %vm564, %v545
      %627 = vst.msk [vmem:[%s610 + $0xc1] sm:$0xff] %vm564, %v546
      %628 = vst.msk [vmem:[%s610 + $0xc9] sm:$0xff] %vm564, %v547
      %629 = vst.msk [vmem:[%s610 + $0xd9] sm:$0xff] %vm564, %v548
      %630 = vst.msk [vmem:[%s610 + $0xe1] sm:$0xff] %vm564, %v549
      %631 = vst.msk [vmem:[%s610 + $0xf1] sm:$0xff] %vm564, %v550
      %632 = vst.msk [vmem:[%s610 + $0xf9] sm:$0xff] %vm564, %v551
      %633 = vst.msk [vmem:[%s610 + $0x109] sm:$0xff] %vm564, %v552
      %634 = vst.msk [vmem:[%s610 + $0x111] sm:$0xff] %vm564, %v553
      %635 = vst.msk [vmem:[%s610 + $0x121] sm:$0xff] %vm564, %v554
      %636 = vst.msk [vmem:[%s610 + $0x129] sm:$0xff] %vm564, %v555
      %637 = vst.msk [vmem:[%s610 + $0x139] sm:$0xff] %vm564, %v556
      %638 = vst.msk [vmem:[%s610 + $0x141] sm:$0xff] %vm564, %v557
      %639 = vst.msk [vmem:[%s610 + $0x151] sm:$0xff] %vm564, %v558
      %640 = vst.msk [vmem:[%s610 + $0x159] sm:$0xff] %vm564, %v559
      %641 = vst.msk [vmem:[%s610 + $0x169] sm:$0xff] %vm564, %v560
      %642 = vst.msk [vmem:[%s610 + $0x171] sm:$0xff] %vm564, %v561
      %v643 = vld [vmem:[#allocation2] sm:$0xff]
      %v644 = vld [vmem:[#allocation2 + $0x8] sm:$0xff]
      %v645 = vld [vmem:[#allocation2 + $0x18] sm:$0xff]
      %v646 = vld [vmem:[#allocation2 + $0x20] sm:$0xff]
      %v647 = vld [vmem:[#allocation2 + $0x30] sm:$0xff]
      %v648 = vld [vmem:[#allocation2 + $0x38] sm:$0xff]
      %v649 = vld [vmem:[#allocation2 + $0x48] sm:$0xff]
      %v650 = vld [vmem:[#allocation2 + $0x50] sm:$0xff]
      %v651 = vld [vmem:[#allocation2 + $0x60] sm:$0xff]
      %v652 = vld [vmem:[#allocation2 + $0x68] sm:$0xff]
      %v653 = vld [vmem:[#allocation2 + $0x78] sm:$0xff]
      %v654 = vld [vmem:[#allocation2 + $0x80] sm:$0xff]
      %v655 = vld [vmem:[#allocation2 + $0x90] sm:$0xff]
      %v656 = vld [vmem:[#allocation2 + $0x98] sm:$0xff]
      %v657 = vld [vmem:[#allocation2 + $0xa8] sm:$0xff]
      %v658 = vld [vmem:[#allocation2 + $0xb0] sm:$0xff]
      %v659 = vld [vmem:[#allocation2 + $0xc0] sm:$0xff]
      %v660 = vld [vmem:[#allocation2 + $0xc8] sm:$0xff]
      %v661 = vld [vmem:[#allocation2 + $0xd8] sm:$0xff]
      %v662 = vld [vmem:[#allocation2 + $0xe0] sm:$0xff]
      %v663 = vld [vmem:[#allocation2 + $0xf0] sm:$0xff]
      %v664 = vld [vmem:[#allocation2 + $0xf8] sm:$0xff]
      %v665 = vld [vmem:[#allocation2 + $0x108] sm:$0xff]
      %v666 = vld [vmem:[#allocation2 + $0x110] sm:$0xff]
      %v667 = vld [vmem:[#allocation2 + $0x120] sm:$0xff]
      %v668 = vld [vmem:[#allocation2 + $0x128] sm:$0xff]
      %v669 = vld [vmem:[#allocation2 + $0x138] sm:$0xff]
      %v670 = vld [vmem:[#allocation2 + $0x140] sm:$0xff]
      %v671 = vld [vmem:[#allocation2 + $0x150] sm:$0xff]
      %v672 = vld [vmem:[#allocation2 + $0x158] sm:$0xff]
      %v673 = vld [vmem:[#allocation2 + $0x168] sm:$0xff]
      %v674 = vld [vmem:[#allocation2 + $0x170] sm:$0xff]
      %v675 = vperm.slane %v562, 0
      %v676 = vmul.f32 %v643, %v675
      %v677 = vmul.f32 %v644, %v675
      %v678 = vmul.f32 %v645, %v675
      %v679 = vmul.f32 %v646, %v675
      %v680 = vmul.f32 %v647, %v675
      %v681 = vmul.f32 %v648, %v675
      %v682 = vmul.f32 %v649, %v675
      %v683 = vmul.f32 %v650, %v675
      %v684 = vmul.f32 %v651, %v675
      %v685 = vmul.f32 %v652, %v675
      %v686 = vmul.f32 %v653, %v675
      %v687 = vmul.f32 %v654, %v675
      %v688 = vmul.f32 %v655, %v675
      %v689 = vmul.f32 %v656, %v675
      %v690 = vmul.f32 %v657, %v675
      %v691 = vmul.f32 %v658, %v675
      %v692 = vmul.f32 %v659, %v675
      %v693 = vmul.f32 %v660, %v675
      %v694 = vmul.f32 %v661, %v675
      %v695 = vmul.f32 %v662, %v675
      %v696 = vmul.f32 %v663, %v675
      %v697 = vmul.f32 %v664, %v675
      %v698 = vmul.f32 %v665, %v675
      %v699 = vmul.f32 %v666, %v675
      %v700 = vmul.f32 %v667, %v675
      %v701 = vmul.f32 %v668, %v675
      %v702 = vmul.f32 %v669, %v675
      %v703 = vmul.f32 %v670, %v675
      %v704 = vmul.f32 %v671, %v675
      %v705 = vmul.f32 %v672, %v675
      %v706 = vmul.f32 %v673, %v675
      %v707 = vmul.f32 %v674, %v675
      %v708 = vld [vmem:[#allocation2 + $0x1] sm:$0xff]
      %v709 = vld [vmem:[#allocation2 + $0x9] sm:$0xff]
      %v710 = vld [vmem:[#allocation2 + $0x19] sm:$0xff]
      %v711 = vld [vmem:[#allocation2 + $0x21] sm:$0xff]
      %v712 = vld [vmem:[#allocation2 + $0x31] sm:$0xff]
      %v713 = vld [vmem:[#allocation2 + $0x39] sm:$0xff]
      %v714 = vld [vmem:[#allocation2 + $0x49] sm:$0xff]
      %v715 = vld [vmem:[#allocation2 + $0x51] sm:$0xff]
      %v716 = vld [vmem:[#allocation2 + $0x61] sm:$0xff]
      %v717 = vld [vmem:[#allocation2 + $0x69] sm:$0xff]
      %v718 = vld [vmem:[#allocation2 + $0x79] sm:$0xff]
      %v719 = vld [vmem:[#allocation2 + $0x81] sm:$0xff]
      %v720 = vld [vmem:[#allocation2 + $0x91] sm:$0xff]
      %v721 = vld [vmem:[#allocation2 + $0x99] sm:$0xff]
      %v722 = vld [vmem:[#allocation2 + $0xa9] sm:$0xff]
      %v723 = vld [vmem:[#allocation2 + $0xb1] sm:$0xff]
      %v724 = vld [vmem:[#allocation2 + $0xc1] sm:$0xff]
      %v725 = vld [vmem:[#allocation2 + $0xc9] sm:$0xff]
      %v726 = vld [vmem:[#allocation2 + $0xd9] sm:$0xff]
      %v727 = vld [vmem:[#allocation2 + $0xe1] sm:$0xff]
      %v728 = vld [vmem:[#allocation2 + $0xf1] sm:$0xff]
      %v729 = vld [vmem:[#allocation2 + $0xf9] sm:$0xff]
      %v730 = vld [vmem:[#allocation2 + $0x109] sm:$0xff]
      %v731 = vld [vmem:[#allocation2 + $0x111] sm:$0xff]
      %v732 = vld [vmem:[#allocation2 + $0x121] sm:$0xff]
      %v733 = vld [vmem:[#allocation2 + $0x129] sm:$0xff]
      %v734 = vld [vmem:[#allocation2 + $0x139] sm:$0xff]
      %v735 = vld [vmem:[#allocation2 + $0x141] sm:$0xff]
      %v736 = vld [vmem:[#allocation2 + $0x151] sm:$0xff]
      %v737 = vld [vmem:[#allocation2 + $0x159] sm:$0xff]
      %v738 = vld [vmem:[#allocation2 + $0x169] sm:$0xff]
      %v739 = vld [vmem:[#allocation2 + $0x171] sm:$0xff]
      %v740 = vperm.slane %v562, 1
      %v741 = vmul.f32 %v708, %v740
      %v742 = vmul.f32 %v709, %v740
      %v743 = vmul.f32 %v710, %v740
      %v744 = vmul.f32 %v711, %v740
      %v745 = vmul.f32 %v712, %v740
      %v746 = vmul.f32 %v713, %v740
      %v747 = vmul.f32 %v714, %v740
      %v748 = vmul.f32 %v715, %v740
      %v749 = vmul.f32 %v716, %v740
      %v750 = vmul.f32 %v717, %v740
      %v751 = vmul.f32 %v718, %v740
      %v752 = vmul.f32 %v719, %v740
      %v753 = vmul.f32 %v720, %v740
      %v754 = vmul.f32 %v721, %v740
      %v755 = vmul.f32 %v722, %v740
      %v756 = vmul.f32 %v723, %v740
      %v757 = vmul.f32 %v724, %v740
      %v758 = vmul.f32 %v725, %v740
      %v759 = vmul.f32 %v726, %v740
      %v760 = vmul.f32 %v727, %v740
      %v761 = vmul.f32 %v728, %v740
      %v762 = vmul.f32 %v729, %v740
      %v763 = vmul.f32 %v730, %v740
      %v764 = vmul.f32 %v731, %v740
      %v765 = vmul.f32 %v732, %v740
      %v766 = vmul.f32 %v733, %v740
      %v767 = vmul.f32 %v734, %v740
      %v768 = vmul.f32 %v735, %v740
      %v769 = vmul.f32 %v736, %v740
      %v770 = vmul.f32 %v737, %v740
      %v771 = vmul.f32 %v738, %v740
      %v772 = vmul.f32 %v739, %v740
      %v773 = vadd.f32 %v676, %v741
      %v774 = vadd.f32 %v677, %v742
      %v775 = vadd.f32 %v678, %v743
      %v776 = vadd.f32 %v679, %v744
      %v777 = vadd.f32 %v680, %v745
      %v778 = vadd.f32 %v681, %v746
      %v779 = vadd.f32 %v682, %v747
      %v780 = vadd.f32 %v683, %v748
      %v781 = vadd.f32 %v684, %v749
      %v782 = vadd.f32 %v685, %v750
      %v783 = vadd.f32 %v686, %v751
      %v784 = vadd.f32 %v687, %v752
      %v785 = vadd.f32 %v688, %v753
      %v786 = vadd.f32 %v689, %v754
      %v787 = vadd.f32 %v690, %v755
      %v788 = vadd.f32 %v691, %v756
      %v789 = vadd.f32 %v692, %v757
      %v790 = vadd.f32 %v693, %v758
      %v791 = vadd.f32 %v694, %v759
      %v792 = vadd.f32 %v695, %v760
      %v793 = vadd.f32 %v696, %v761
      %v794 = vadd.f32 %v697, %v762
      %v795 = vadd.f32 %v698, %v763
      %v796 = vadd.f32 %v699, %v764
      %v797 = vadd.f32 %v700, %v765
      %v798 = vadd.f32 %v701, %v766
      %v799 = vadd.f32 %v702, %v767
      %v800 = vadd.f32 %v703, %v768
      %v801 = vadd.f32 %v704, %v769
      %v802 = vadd.f32 %v705, %v770
      %v803 = vadd.f32 %v706, %v771
      %v804 = vadd.f32 %v707, %v772
      %v805 = vld [vmem:[#allocation2 + $0x2] sm:$0xff]
      %v806 = vld [vmem:[#allocation2 + $0xa] sm:$0xff]
      %v807 = vld [vmem:[#allocation2 + $0x1a] sm:$0xff]
      %v808 = vld [vmem:[#allocation2 + $0x22] sm:$0xff]
      %v809 = vld [vmem:[#allocation2 + $0x32] sm:$0xff]
      %v810 = vld [vmem:[#allocation2 + $0x3a] sm:$0xff]
      %v811 = vld [vmem:[#allocation2 + $0x4a] sm:$0xff]
      %v812 = vld [vmem:[#allocation2 + $0x52] sm:$0xff]
      %v813 = vld [vmem:[#allocation2 + $0x62] sm:$0xff]
      %v814 = vld [vmem:[#allocation2 + $0x6a] sm:$0xff]
      %v815 = vld [vmem:[#allocation2 + $0x7a] sm:$0xff]
      %v816 = vld [vmem:[#allocation2 + $0x82] sm:$0xff]
      %v817 = vld [vmem:[#allocation2 + $0x92] sm:$0xff]
      %v818 = vld [vmem:[#allocation2 + $0x9a] sm:$0xff]
      %v819 = vld [vmem:[#allocation2 + $0xaa] sm:$0xff]
      %v820 = vld [vmem:[#allocation2 + $0xb2] sm:$0xff]
      %v821 = vld [vmem:[#allocation2 + $0xc2] sm:$0xff]
      %v822 = vld [vmem:[#allocation2 + $0xca] sm:$0xff]
      %v823 = vld [vmem:[#allocation2 + $0xda] sm:$0xff]
      %v824 = vld [vmem:[#allocation2 + $0xe2] sm:$0xff]
      %v825 = vld [vmem:[#allocation2 + $0xf2] sm:$0xff]
      %v826 = vld [vmem:[#allocation2 + $0xfa] sm:$0xff]
      %v827 = vld [vmem:[#allocation2 + $0x10a] sm:$0xff]
      %v828 = vld [vmem:[#allocation2 + $0x112] sm:$0xff]
      %v829 = vld [vmem:[#allocation2 + $0x122] sm:$0xff]
      %v830 = vld [vmem:[#allocation2 + $0x12a] sm:$0xff]
      %v831 = vld [vmem:[#allocation2 + $0x13a] sm:$0xff]
      %v832 = vld [vmem:[#allocation2 + $0x142] sm:$0xff]
      %v833 = vld [vmem:[#allocation2 + $0x152] sm:$0xff]
      %v834 = vld [vmem:[#allocation2 + $0x15a] sm:$0xff]
      %v835 = vld [vmem:[#allocation2 + $0x16a] sm:$0xff]
      %v836 = vld [vmem:[#allocation2 + $0x172] sm:$0xff]
      %v837 = vperm.slane %v562, 2
      %v838 = vmul.f32 %v805, %v837
      %v839 = vmul.f32 %v806, %v837
      %v840 = vmul.f32 %v807, %v837
      %v841 = vmul.f32 %v808, %v837
      %v842 = vmul.f32 %v809, %v837
      %v843 = vmul.f32 %v810, %v837
      %v844 = vmul.f32 %v811, %v837
      %v845 = vmul.f32 %v812, %v837
      %v846 = vmul.f32 %v813, %v837
      %v847 = vmul.f32 %v814, %v837
      %v848 = vmul.f32 %v815, %v837
      %v849 = vmul.f32 %v816, %v837
      %v850 = vmul.f32 %v817, %v837
      %v851 = vmul.f32 %v818, %v837
      %v852 = vmul.f32 %v819, %v837
      %v853 = vmul.f32 %v820, %v837
      %v854 = vmul.f32 %v821, %v837
      %v855 = vmul.f32 %v822, %v837
      %v856 = vmul.f32 %v823, %v837
      %v857 = vmul.f32 %v824, %v837
      %v858 = vmul.f32 %v825, %v837
      %v859 = vmul.f32 %v826, %v837
      %v860 = vmul.f32 %v827, %v837
      %v861 = vmul.f32 %v828, %v837
      %v862 = vmul.f32 %v829, %v837
      %v863 = vmul.f32 %v830, %v837
      %v864 = vmul.f32 %v831, %v837
      %v865 = vmul.f32 %v832, %v837
      %v866 = vmul.f32 %v833, %v837
      %v867 = vmul.f32 %v834, %v837
      %v868 = vmul.f32 %v835, %v837
      %v869 = vmul.f32 %v836, %v837
      %v870 = vadd.f32 %v773, %v838
      %v871 = vadd.f32 %v774, %v839
      %v872 = vadd.f32 %v775, %v840
      %v873 = vadd.f32 %v776, %v841
      %v874 = vadd.f32 %v777, %v842
      %v875 = vadd.f32 %v778, %v843
      %v876 = vadd.f32 %v779, %v844
      %v877 = vadd.f32 %v780, %v845
      %v878 = vadd.f32 %v781, %v846
      %v879 = vadd.f32 %v782, %v847
      %v880 = vadd.f32 %v783, %v848
      %v881 = vadd.f32 %v784, %v849
      %v882 = vadd.f32 %v785, %v850
      %v883 = vadd.f32 %v786, %v851
      %v884 = vadd.f32 %v787, %v852
      %v885 = vadd.f32 %v788, %v853
      %v886 = vadd.f32 %v789, %v854
      %v887 = vadd.f32 %v790, %v855
      %v888 = vadd.f32 %v791, %v856
      %v889 = vadd.f32 %v792, %v857
      %v890 = vadd.f32 %v793, %v858
      %v891 = vadd.f32 %v794, %v859
      %v892 = vadd.f32 %v795, %v860
      %v893 = vadd.f32 %v796, %v861
      %v894 = vadd.f32 %v797, %v862
      %v895 = vadd.f32 %v798, %v863
      %v896 = vadd.f32 %v799, %v864
      %v897 = vadd.f32 %v800, %v865
      %v898 = vadd.f32 %v801, %v866
      %v899 = vadd.f32 %v802, %v867
      %v900 = vadd.f32 %v803, %v868
      %v901 = vadd.f32 %v804, %v869
      %v902 = vld [vmem:[%s610] sm:$0xff]
      %v903 = vld [vmem:[%s610 + $0x8] sm:$0xff]
      %v904 = vld [vmem:[%s610 + $0x18] sm:$0xff]
      %v905 = vld [vmem:[%s610 + $0x20] sm:$0xff]
      %v906 = vld [vmem:[%s610 + $0x30] sm:$0xff]
      %v907 = vld [vmem:[%s610 + $0x38] sm:$0xff]
      %v908 = vld [vmem:[%s610 + $0x48] sm:$0xff]
      %v909 = vld [vmem:[%s610 + $0x50] sm:$0xff]
      %v910 = vld [vmem:[%s610 + $0x60] sm:$0xff]
      %v911 = vld [vmem:[%s610 + $0x68] sm:$0xff]
      %v912 = vld [vmem:[%s610 + $0x78] sm:$0xff]
      %v913 = vld [vmem:[%s610 + $0x80] sm:$0xff]
      %v914 = vld [vmem:[%s610 + $0x90] sm:$0xff]
      %v915 = vld [vmem:[%s610 + $0x98] sm:$0xff]
      %v916 = vld [vmem:[%s610 + $0xa8] sm:$0xff]
      %v917 = vld [vmem:[%s610 + $0xb0] sm:$0xff]
      %v918 = vld [vmem:[%s610 + $0xc0] sm:$0xff]
      %v919 = vld [vmem:[%s610 + $0xc8] sm:$0xff]
      %v920 = vld [vmem:[%s610 + $0xd8] sm:$0xff]
      %v921 = vld [vmem:[%s610 + $0xe0] sm:$0xff]
      %v922 = vld [vmem:[%s610 + $0xf0] sm:$0xff]
      %v923 = vld [vmem:[%s610 + $0xf8] sm:$0xff]
      %v924 = vld [vmem:[%s610 + $0x108] sm:$0xff]
      %v925 = vld [vmem:[%s610 + $0x110] sm:$0xff]
      %v926 = vld [vmem:[%s610 + $0x120] sm:$0xff]
      %v927 = vld [vmem:[%s610 + $0x128] sm:$0xff]
      %v928 = vld [vmem:[%s610 + $0x138] sm:$0xff]
      %v929 = vld [vmem:[%s610 + $0x140] sm:$0xff]
      %v930 = vld [vmem:[%s610 + $0x150] sm:$0xff]
      %v931 = vld [vmem:[%s610 + $0x158] sm:$0xff]
      %v932 = vld [vmem:[%s610 + $0x168] sm:$0xff]
      %v933 = vld [vmem:[%s610 + $0x170] sm:$0xff]
      %v934 = vperm.slane %v562, 3
      %v935 = vmul.f32 %v902, %v934
      %v936 = vmul.f32 %v903, %v934
      %v937 = vmul.f32 %v904, %v934
      %v938 = vmul.f32 %v905, %v934
      %v939 = vmul.f32 %v906, %v934
      %v940 = vmul.f32 %v907, %v934
      %v941 = vmul.f32 %v908, %v934
      %v942 = vmul.f32 %v909, %v934
      %v943 = vmul.f32 %v910, %v934
      %v944 = vmul.f32 %v911, %v934
      %v945 = vmul.f32 %v912, %v934
      %v946 = vmul.f32 %v913, %v934
      %v947 = vmul.f32 %v914, %v934
      %v948 = vmul.f32 %v915, %v934
      %v949 = vmul.f32 %v916, %v934
      %v950 = vmul.f32 %v917, %v934
      %v951 = vmul.f32 %v918, %v934
      %v952 = vmul.f32 %v919, %v934
      %v953 = vmul.f32 %v920, %v934
      %v954 = vmul.f32 %v921, %v934
      %v955 = vmul.f32 %v922, %v934
      %v956 = vmul.f32 %v923, %v934
      %v957 = vmul.f32 %v924, %v934
      %v958 = vmul.f32 %v925, %v934
      %v959 = vmul.f32 %v926, %v934
      %v960 = vmul.f32 %v927, %v934
      %v961 = vmul.f32 %v928, %v934
      %v962 = vmul.f32 %v929, %v934
      %v963 = vmul.f32 %v930, %v934
      %v964 = vmul.f32 %v931, %v934
      %v965 = vmul.f32 %v932, %v934
      %v966 = vmul.f32 %v933, %v934
      %v967 = vadd.f32 %v870, %v935
      %v968 = vadd.f32 %v871, %v936
      %v969 = vadd.f32 %v872, %v937
      %v970 = vadd.f32 %v873, %v938
      %v971 = vadd.f32 %v874, %v939
      %v972 = vadd.f32 %v875, %v940
      %v973 = vadd.f32 %v876, %v941
      %v974 = vadd.f32 %v877, %v942
      %v975 = vadd.f32 %v878, %v943
      %v976 = vadd.f32 %v879, %v944
      %v977 = vadd.f32 %v880, %v945
      %v978 = vadd.f32 %v881, %v946
      %v979 = vadd.f32 %v882, %v947
      %v980 = vadd.f32 %v883, %v948
      %v981 = vadd.f32 %v884, %v949
      %v982 = vadd.f32 %v885, %v950
      %v983 = vadd.f32 %v886, %v951
      %v984 = vadd.f32 %v887, %v952
      %v985 = vadd.f32 %v888, %v953
      %v986 = vadd.f32 %v889, %v954
      %v987 = vadd.f32 %v890, %v955
      %v988 = vadd.f32 %v891, %v956
      %v989 = vadd.f32 %v892, %v957
      %v990 = vadd.f32 %v893, %v958
      %v991 = vadd.f32 %v894, %v959
      %v992 = vadd.f32 %v895, %v960
      %v993 = vadd.f32 %v896, %v961
      %v994 = vadd.f32 %v897, %v962
      %v995 = vadd.f32 %v898, %v963
      %v996 = vadd.f32 %v899, %v964
      %v997 = vadd.f32 %v900, %v965
      %v998 = vadd.f32 %v901, %v966
      %v999 = vld [vmem:[%s610 + $0x1] sm:$0xff]
      %v1000 = vld [vmem:[%s610 + $0x9] sm:$0xff]
      %v1001 = vld [vmem:[%s610 + $0x19] sm:$0xff]
      %v1002 = vld [vmem:[%s610 + $0x21] sm:$0xff]
      %v1003 = vld [vmem:[%s610 + $0x31] sm:$0xff]
      %v1004 = vld [vmem:[%s610 + $0x39] sm:$0xff]
      %v1005 = vld [vmem:[%s610 + $0x49] sm:$0xff]
      %v1006 = vld [vmem:[%s610 + $0x51] sm:$0xff]
      %v1007 = vld [vmem:[%s610 + $0x61] sm:$0xff]
      %v1008 = vld [vmem:[%s610 + $0x69] sm:$0xff]
      %v1009 = vld [vmem:[%s610 + $0x79] sm:$0xff]
      %v1010 = vld [vmem:[%s610 + $0x81] sm:$0xff]
      %v1011 = vld [vmem:[%s610 + $0x91] sm:$0xff]
      %v1012 = vld [vmem:[%s610 + $0x99] sm:$0xff]
      %v1013 = vld [vmem:[%s610 + $0xa9] sm:$0xff]
      %v1014 = vld [vmem:[%s610 + $0xb1] sm:$0xff]
      %v1015 = vld [vmem:[%s610 + $0xc1] sm:$0xff]
      %v1016 = vld [vmem:[%s610 + $0xc9] sm:$0xff]
      %v1017 = vld [vmem:[%s610 + $0xd9] sm:$0xff]
      %v1018 = vld [vmem:[%s610 + $0xe1] sm:$0xff]
      %v1019 = vld [vmem:[%s610 + $0xf1] sm:$0xff]
      %v1020 = vld [vmem:[%s610 + $0xf9] sm:$0xff]
      %v1021 = vld [vmem:[%s610 + $0x109] sm:$0xff]
      %v1022 = vld [vmem:[%s610 + $0x111] sm:$0xff]
      %v1023 = vld [vmem:[%s610 + $0x121] sm:$0xff]
      %v1024 = vld [vmem:[%s610 + $0x129] sm:$0xff]
      %v1025 = vld [vmem:[%s610 + $0x139] sm:$0xff]
      %v1026 = vld [vmem:[%s610 + $0x141] sm:$0xff]
      %v1027 = vld [vmem:[%s610 + $0x151] sm:$0xff]
      %v1028 = vld [vmem:[%s610 + $0x159] sm:$0xff]
      %v1029 = vld [vmem:[%s610 + $0x169] sm:$0xff]
      %v1030 = vld [vmem:[%s610 + $0x171] sm:$0xff]
      %v1031 = vperm.slane %v562, 4
      %v1032 = vmul.f32 %v999, %v1031
      %v1033 = vmul.f32 %v1000, %v1031
      %v1034 = vmul.f32 %v1001, %v1031
      %v1035 = vmul.f32 %v1002, %v1031
      %v1036 = vmul.f32 %v1003, %v1031
      %v1037 = vmul.f32 %v1004, %v1031
      %v1038 = vmul.f32 %v1005, %v1031
      %v1039 = vmul.f32 %v1006, %v1031
      %v1040 = vmul.f32 %v1007, %v1031
      %v1041 = vmul.f32 %v1008, %v1031
      %v1042 = vmul.f32 %v1009, %v1031
      %v1043 = vmul.f32 %v1010, %v1031
      %v1044 = vmul.f32 %v1011, %v1031
      %v1045 = vmul.f32 %v1012, %v1031
      %v1046 = vmul.f32 %v1013, %v1031
      %v1047 = vmul.f32 %v1014, %v1031
      %v1048 = vmul.f32 %v1015, %v1031
      %v1049 = vmul.f32 %v1016, %v1031
      %v1050 = vmul.f32 %v1017, %v1031
      %v1051 = vmul.f32 %v1018, %v1031
      %v1052 = vmul.f32 %v1019, %v1031
      %v1053 = vmul.f32 %v1020, %v1031
      %v1054 = vmul.f32 %v1021, %v1031
      %v1055 = vmul.f32 %v1022, %v1031
      %v1056 = vmul.f32 %v1023, %v1031
      %v1057 = vmul.f32 %v1024, %v1031
      %v1058 = vmul.f32 %v1025, %v1031
      %v1059 = vmul.f32 %v1026, %v1031
      %v1060 = vmul.f32 %v1027, %v1031
      %v1061 = vmul.f32 %v1028, %v1031
      %v1062 = vmul.f32 %v1029, %v1031
      %v1063 = vmul.f32 %v1030, %v1031
      %v1064 = vadd.f32 %v967, %v1032
      %v1065 = vadd.f32 %v968, %v1033
      %v1066 = vadd.f32 %v969, %v1034
      %v1067 = vadd.f32 %v970, %v1035
      %v1068 = vadd.f32 %v971, %v1036
      %v1069 = vadd.f32 %v972, %v1037
      %v1070 = vadd.f32 %v973, %v1038
      %v1071 = vadd.f32 %v974, %v1039
      %v1072 = vadd.f32 %v975, %v1040
      %v1073 = vadd.f32 %v976, %v1041
      %v1074 = vadd.f32 %v977, %v1042
      %v1075 = vadd.f32 %v978, %v1043
      %v1076 = vadd.f32 %v979, %v1044
      %v1077 = vadd.f32 %v980, %v1045
      %v1078 = vadd.f32 %v981, %v1046
      %v1079 = vadd.f32 %v982, %v1047
      %v1080 = vadd.f32 %v983, %v1048
      %v1081 = vadd.f32 %v984, %v1049
      %v1082 = vadd.f32 %v985, %v1050
      %v1083 = vadd.f32 %v986, %v1051
      %v1084 = vadd.f32 %v987, %v1052
      %v1085 = vadd.f32 %v988, %v1053
      %v1086 = vadd.f32 %v989, %v1054
      %v1087 = vadd.f32 %v990, %v1055
      %v1088 = vadd.f32 %v991, %v1056
      %v1089 = vadd.f32 %v992, %v1057
      %v1090 = vadd.f32 %v993, %v1058
      %v1091 = vadd.f32 %v994, %v1059
      %v1092 = vadd.f32 %v995, %v1060
      %v1093 = vadd.f32 %v996, %v1061
      %v1094 = vadd.f32 %v997, %v1062
      %v1095 = vadd.f32 %v998, %v1063
      %v1096 = vld [vmem:[%s610 + $0x2] sm:$0xff]
      %v1097 = vld [vmem:[%s610 + $0xa] sm:$0xff]
      %v1098 = vld [vmem:[%s610 + $0x1a] sm:$0xff]
      %v1099 = vld [vmem:[%s610 + $0x22] sm:$0xff]
      %v1100 = vld [vmem:[%s610 + $0x32] sm:$0xff]
      %v1101 = vld [vmem:[%s610 + $0x3a] sm:$0xff]
      %v1102 = vld [vmem:[%s610 + $0x4a] sm:$0xff]
      %v1103 = vld [vmem:[%s610 + $0x52] sm:$0xff]
      %v1104 = vld [vmem:[%s610 + $0x62] sm:$0xff]
      %v1105 = vld [vmem:[%s610 + $0x6a] sm:$0xff]
      %v1106 = vld [vmem:[%s610 + $0x7a] sm:$0xff]
      %v1107 = vld [vmem:[%s610 + $0x82] sm:$0xff]
      %v1108 = vld [vmem:[%s610 + $0x92] sm:$0xff]
      %v1109 = vld [vmem:[%s610 + $0x9a] sm:$0xff]
      %v1110 = vld [vmem:[%s610 + $0xaa] sm:$0xff]
      %v1111 = vld [vmem:[%s610 + $0xb2] sm:$0xff]
      %v1112 = vld [vmem:[%s610 + $0xc2] sm:$0xff]
      %v1113 = vld [vmem:[%s610 + $0xca] sm:$0xff]
      %v1114 = vld [vmem:[%s610 + $0xda] sm:$0xff]
      %v1115 = vld [vmem:[%s610 + $0xe2] sm:$0xff]
      %v1116 = vld [vmem:[%s610 + $0xf2] sm:$0xff]
      %v1117 = vld [vmem:[%s610 + $0xfa] sm:$0xff]
      %v1118 = vld [vmem:[%s610 + $0x10a] sm:$0xff]
      %v1119 = vld [vmem:[%s610 + $0x112] sm:$0xff]
      %v1120 = vld [vmem:[%s610 + $0x122] sm:$0xff]
      %v1121 = vld [vmem:[%s610 + $0x12a] sm:$0xff]
      %v1122 = vld [vmem:[%s610 + $0x13a] sm:$0xff]
      %v1123 = vld [vmem:[%s610 + $0x142] sm:$0xff]
      %v1124 = vld [vmem:[%s610 + $0x152] sm:$0xff]
      %v1125 = vld [vmem:[%s610 + $0x15a] sm:$0xff]
      %v1126 = vld [vmem:[%s610 + $0x16a] sm:$0xff]
      %v1127 = vld [vmem:[%s610 + $0x172] sm:$0xff]
      %v1128 = vperm.slane %v562, 5
      %v1129 = vmul.f32 %v1096, %v1128
      %v1130 = vmul.f32 %v1097, %v1128
      %v1131 = vmul.f32 %v1098, %v1128
      %v1132 = vmul.f32 %v1099, %v1128
      %v1133 = vmul.f32 %v1100, %v1128
      %v1134 = vmul.f32 %v1101, %v1128
      %v1135 = vmul.f32 %v1102, %v1128
      %v1136 = vmul.f32 %v1103, %v1128
      %v1137 = vmul.f32 %v1104, %v1128
      %v1138 = vmul.f32 %v1105, %v1128
      %v1139 = vmul.f32 %v1106, %v1128
      %v1140 = vmul.f32 %v1107, %v1128
      %v1141 = vmul.f32 %v1108, %v1128
      %v1142 = vmul.f32 %v1109, %v1128
      %v1143 = vmul.f32 %v1110, %v1128
      %v1144 = vmul.f32 %v1111, %v1128
      %v1145 = vmul.f32 %v1112, %v1128
      %v1146 = vmul.f32 %v1113, %v1128
      %v1147 = vmul.f32 %v1114, %v1128
      %v1148 = vmul.f32 %v1115, %v1128
      %v1149 = vmul.f32 %v1116, %v1128
      %v1150 = vmul.f32 %v1117, %v1128
      %v1151 = vmul.f32 %v1118, %v1128
      %v1152 = vmul.f32 %v1119, %v1128
      %v1153 = vmul.f32 %v1120, %v1128
      %v1154 = vmul.f32 %v1121, %v1128
      %v1155 = vmul.f32 %v1122, %v1128
      %v1156 = vmul.f32 %v1123, %v1128
      %v1157 = vmul.f32 %v1124, %v1128
      %v1158 = vmul.f32 %v1125, %v1128
      %v1159 = vmul.f32 %v1126, %v1128
      %v1160 = vmul.f32 %v1127, %v1128
      %v1161 = vadd.f32 %v1064, %v1129
      %v1162 = vadd.f32 %v1065, %v1130
      %v1163 = vadd.f32 %v1066, %v1131
      %v1164 = vadd.f32 %v1067, %v1132
      %v1165 = vadd.f32 %v1068, %v1133
      %v1166 = vadd.f32 %v1069, %v1134
      %v1167 = vadd.f32 %v1070, %v1135
      %v1168 = vadd.f32 %v1071, %v1136
      %v1169 = vadd.f32 %v1072, %v1137
      %v1170 = vadd.f32 %v1073, %v1138
      %v1171 = vadd.f32 %v1074, %v1139
      %v1172 = vadd.f32 %v1075, %v1140
      %v1173 = vadd.f32 %v1076, %v1141
      %v1174 = vadd.f32 %v1077, %v1142
      %v1175 = vadd.f32 %v1078, %v1143
      %v1176 = vadd.f32 %v1079, %v1144
      %v1177 = vadd.f32 %v1080, %v1145
      %v1178 = vadd.f32 %v1081, %v1146
      %v1179 = vadd.f32 %v1082, %v1147
      %v1180 = vadd.f32 %v1083, %v1148
      %v1181 = vadd.f32 %v1084, %v1149
      %v1182 = vadd.f32 %v1085, %v1150
      %v1183 = vadd.f32 %v1086, %v1151
      %v1184 = vadd.f32 %v1087, %v1152
      %v1185 = vadd.f32 %v1088, %v1153
      %v1186 = vadd.f32 %v1089, %v1154
      %v1187 = vadd.f32 %v1090, %v1155
      %v1188 = vadd.f32 %v1091, %v1156
      %v1189 = vadd.f32 %v1092, %v1157
      %v1190 = vadd.f32 %v1093, %v1158
      %v1191 = vadd.f32 %v1094, %v1159
      %v1192 = vadd.f32 %v1095, %v1160
      %s1193 = scalar_lea.vmem [#allocation2], 48
      %v1194 = vld [vmem:[%s1193] sm:$0xff]
      %v1195 = vld [vmem:[%s1193 + $0x8] sm:$0xff]
      %v1196 = vld [vmem:[%s1193 + $0x18] sm:$0xff]
      %v1197 = vld [vmem:[%s1193 + $0x20] sm:$0xff]
      %v1198 = vld [vmem:[%s1193 + $0x30] sm:$0xff]
      %v1199 = vld [vmem:[%s1193 + $0x38] sm:$0xff]
      %v1200 = vld [vmem:[%s1193 + $0x48] sm:$0xff]
      %v1201 = vld [vmem:[%s1193 + $0x50] sm:$0xff]
      %v1202 = vld [vmem:[%s1193 + $0x60] sm:$0xff]
      %v1203 = vld [vmem:[%s1193 + $0x68] sm:$0xff]
      %v1204 = vld [vmem:[%s1193 + $0x78] sm:$0xff]
      %v1205 = vld [vmem:[%s1193 + $0x80] sm:$0xff]
      %v1206 = vld [vmem:[%s1193 + $0x90] sm:$0xff]
      %v1207 = vld [vmem:[%s1193 + $0x98] sm:$0xff]
      %v1208 = vld [vmem:[%s1193 + $0xa8] sm:$0xff]
      %v1209 = vld [vmem:[%s1193 + $0xb0] sm:$0xff]
      %v1210 = vld [vmem:[%s1193 + $0xc0] sm:$0xff]
      %v1211 = vld [vmem:[%s1193 + $0xc8] sm:$0xff]
      %v1212 = vld [vmem:[%s1193 + $0xd8] sm:$0xff]
      %v1213 = vld [vmem:[%s1193 + $0xe0] sm:$0xff]
      %v1214 = vld [vmem:[%s1193 + $0xf0] sm:$0xff]
      %v1215 = vld [vmem:[%s1193 + $0xf8] sm:$0xff]
      %v1216 = vld [vmem:[%s1193 + $0x108] sm:$0xff]
      %v1217 = vld [vmem:[%s1193 + $0x110] sm:$0xff]
      %v1218 = vld [vmem:[%s1193 + $0x120] sm:$0xff]
      %v1219 = vld [vmem:[%s1193 + $0x128] sm:$0xff]
      %v1220 = vld [vmem:[%s1193 + $0x138] sm:$0xff]
      %v1221 = vld [vmem:[%s1193 + $0x140] sm:$0xff]
      %v1222 = vld [vmem:[%s1193 + $0x150] sm:$0xff]
      %v1223 = vld [vmem:[%s1193 + $0x158] sm:$0xff]
      %v1224 = vld [vmem:[%s1193 + $0x168] sm:$0xff]
      %v1225 = vld [vmem:[%s1193 + $0x170] sm:$0xff]
      %v1226 = vperm.slane %v562, 6
      %v1227 = vmul.f32 %v1194, %v1226
      %v1228 = vmul.f32 %v1195, %v1226
      %v1229 = vmul.f32 %v1196, %v1226
      %v1230 = vmul.f32 %v1197, %v1226
      %v1231 = vmul.f32 %v1198, %v1226
      %v1232 = vmul.f32 %v1199, %v1226
      %v1233 = vmul.f32 %v1200, %v1226
      %v1234 = vmul.f32 %v1201, %v1226
      %v1235 = vmul.f32 %v1202, %v1226
      %v1236 = vmul.f32 %v1203, %v1226
      %v1237 = vmul.f32 %v1204, %v1226
      %v1238 = vmul.f32 %v1205, %v1226
      %v1239 = vmul.f32 %v1206, %v1226
      %v1240 = vmul.f32 %v1207, %v1226
      %v1241 = vmul.f32 %v1208, %v1226
      %v1242 = vmul.f32 %v1209, %v1226
      %v1243 = vmul.f32 %v1210, %v1226
      %v1244 = vmul.f32 %v1211, %v1226
      %v1245 = vmul.f32 %v1212, %v1226
      %v1246 = vmul.f32 %v1213, %v1226
      %v1247 = vmul.f32 %v1214, %v1226
      %v1248 = vmul.f32 %v1215, %v1226
      %v1249 = vmul.f32 %v1216, %v1226
      %v1250 = vmul.f32 %v1217, %v1226
      %v1251 = vmul.f32 %v1218, %v1226
      %v1252 = vmul.f32 %v1219, %v1226
      %v1253 = vmul.f32 %v1220, %v1226
      %v1254 = vmul.f32 %v1221, %v1226
      %v1255 = vmul.f32 %v1222, %v1226
      %v1256 = vmul.f32 %v1223, %v1226
      %v1257 = vmul.f32 %v1224, %v1226
      %v1258 = vmul.f32 %v1225, %v1226
      %v1259 = vadd.f32 %v1161, %v1227
      %v1260 = vadd.f32 %v1162, %v1228
      %v1261 = vadd.f32 %v1163, %v1229
      %v1262 = vadd.f32 %v1164, %v1230
      %v1263 = vadd.f32 %v1165, %v1231
      %v1264 = vadd.f32 %v1166, %v1232
      %v1265 = vadd.f32 %v1167, %v1233
      %v1266 = vadd.f32 %v1168, %v1234
      %v1267 = vadd.f32 %v1169, %v1235
      %v1268 = vadd.f32 %v1170, %v1236
      %v1269 = vadd.f32 %v1171, %v1237
      %v1270 = vadd.f32 %v1172, %v1238
      %v1271 = vadd.f32 %v1173, %v1239
      %v1272 = vadd.f32 %v1174, %v1240
      %v1273 = vadd.f32 %v1175, %v1241
      %v1274 = vadd.f32 %v1176, %v1242
      %v1275 = vadd.f32 %v1177, %v1243
      %v1276 = vadd.f32 %v1178, %v1244
      %v1277 = vadd.f32 %v1179, %v1245
      %v1278 = vadd.f32 %v1180, %v1246
      %v1279 = vadd.f32 %v1181, %v1247
      %v1280 = vadd.f32 %v1182, %v1248
      %v1281 = vadd.f32 %v1183, %v1249
      %v1282 = vadd.f32 %v1184, %v1250
      %v1283 = vadd.f32 %v1185, %v1251
      %v1284 = vadd.f32 %v1186, %v1252
      %v1285 = vadd.f32 %v1187, %v1253
      %v1286 = vadd.f32 %v1188, %v1254
      %v1287 = vadd.f32 %v1189, %v1255
      %v1288 = vadd.f32 %v1190, %v1256
      %v1289 = vadd.f32 %v1191, %v1257
      %v1290 = vadd.f32 %v1192, %v1258
      %v1291 = vld [vmem:[%s1193 + $0x1] sm:$0xff]
      %v1292 = vld [vmem:[%s1193 + $0x9] sm:$0xff]
      %v1293 = vld [vmem:[%s1193 + $0x19] sm:$0xff]
      %v1294 = vld [vmem:[%s1193 + $0x21] sm:$0xff]
      %v1295 = vld [vmem:[%s1193 + $0x31] sm:$0xff]
      %v1296 = vld [vmem:[%s1193 + $0x39] sm:$0xff]
      %v1297 = vld [vmem:[%s1193 + $0x49] sm:$0xff]
      %v1298 = vld [vmem:[%s1193 + $0x51] sm:$0xff]
      %v1299 = vld [vmem:[%s1193 + $0x61] sm:$0xff]
      %v1300 = vld [vmem:[%s1193 + $0x69] sm:$0xff]
      %v1301 = vld [vmem:[%s1193 + $0x79] sm:$0xff]
      %v1302 = vld [vmem:[%s1193 + $0x81] sm:$0xff]
      %v1303 = vld [vmem:[%s1193 + $0x91] sm:$0xff]
      %v1304 = vld [vmem:[%s1193 + $0x99] sm:$0xff]
      %v1305 = vld [vmem:[%s1193 + $0xa9] sm:$0xff]
      %v1306 = vld [vmem:[%s1193 + $0xb1] sm:$0xff]
      %v1307 = vld [vmem:[%s1193 + $0xc1] sm:$0xff]
      %v1308 = vld [vmem:[%s1193 + $0xc9] sm:$0xff]
      %v1309 = vld [vmem:[%s1193 + $0xd9] sm:$0xff]
      %v1310 = vld [vmem:[%s1193 + $0xe1] sm:$0xff]
      %v1311 = vld [vmem:[%s1193 + $0xf1] sm:$0xff]
      %v1312 = vld [vmem:[%s1193 + $0xf9] sm:$0xff]
      %v1313 = vld [vmem:[%s1193 + $0x109] sm:$0xff]
      %v1314 = vld [vmem:[%s1193 + $0x111] sm:$0xff]
      %v1315 = vld [vmem:[%s1193 + $0x121] sm:$0xff]
      %v1316 = vld [vmem:[%s1193 + $0x129] sm:$0xff]
      %v1317 = vld [vmem:[%s1193 + $0x139] sm:$0xff]
      %v1318 = vld [vmem:[%s1193 + $0x141] sm:$0xff]
      %v1319 = vld [vmem:[%s1193 + $0x151] sm:$0xff]
      %v1320 = vld [vmem:[%s1193 + $0x159] sm:$0xff]
      %v1321 = vld [vmem:[%s1193 + $0x169] sm:$0xff]
      %v1322 = vld [vmem:[%s1193 + $0x171] sm:$0xff]
      %v1323 = vperm.slane %v562, 7
      %v1324 = vmul.f32 %v1291, %v1323
      %v1325 = vmul.f32 %v1292, %v1323
      %v1326 = vmul.f32 %v1293, %v1323
      %v1327 = vmul.f32 %v1294, %v1323
      %v1328 = vmul.f32 %v1295, %v1323
      %v1329 = vmul.f32 %v1296, %v1323
      %v1330 = vmul.f32 %v1297, %v1323
      %v1331 = vmul.f32 %v1298, %v1323
      %v1332 = vmul.f32 %v1299, %v1323
      %v1333 = vmul.f32 %v1300, %v1323
      %v1334 = vmul.f32 %v1301, %v1323
      %v1335 = vmul.f32 %v1302, %v1323
      %v1336 = vmul.f32 %v1303, %v1323
      %v1337 = vmul.f32 %v1304, %v1323
      %v1338 = vmul.f32 %v1305, %v1323
      %v1339 = vmul.f32 %v1306, %v1323
      %v1340 = vmul.f32 %v1307, %v1323
      %v1341 = vmul.f32 %v1308, %v1323
      %v1342 = vmul.f32 %v1309, %v1323
      %v1343 = vmul.f32 %v1310, %v1323
      %v1344 = vmul.f32 %v1311, %v1323
      %v1345 = vmul.f32 %v1312, %v1323
      %v1346 = vmul.f32 %v1313, %v1323
      %v1347 = vmul.f32 %v1314, %v1323
      %v1348 = vmul.f32 %v1315, %v1323
      %v1349 = vmul.f32 %v1316, %v1323
      %v1350 = vmul.f32 %v1317, %v1323
      %v1351 = vmul.f32 %v1318, %v1323
      %v1352 = vmul.f32 %v1319, %v1323
      %v1353 = vmul.f32 %v1320, %v1323
      %v1354 = vmul.f32 %v1321, %v1323
      %v1355 = vmul.f32 %v1322, %v1323
      %v1356 = vadd.f32 %v1259, %v1324
      %v1357 = vadd.f32 %v1260, %v1325
      %v1358 = vadd.f32 %v1261, %v1326
      %v1359 = vadd.f32 %v1262, %v1327
      %v1360 = vadd.f32 %v1263, %v1328
      %v1361 = vadd.f32 %v1264, %v1329
      %v1362 = vadd.f32 %v1265, %v1330
      %v1363 = vadd.f32 %v1266, %v1331
      %v1364 = vadd.f32 %v1267, %v1332
      %v1365 = vadd.f32 %v1268, %v1333
      %v1366 = vadd.f32 %v1269, %v1334
      %v1367 = vadd.f32 %v1270, %v1335
      %v1368 = vadd.f32 %v1271, %v1336
      %v1369 = vadd.f32 %v1272, %v1337
      %v1370 = vadd.f32 %v1273, %v1338
      %v1371 = vadd.f32 %v1274, %v1339
      %v1372 = vadd.f32 %v1275, %v1340
      %v1373 = vadd.f32 %v1276, %v1341
      %v1374 = vadd.f32 %v1277, %v1342
      %v1375 = vadd.f32 %v1278, %v1343
      %v1376 = vadd.f32 %v1279, %v1344
      %v1377 = vadd.f32 %v1280, %v1345
      %v1378 = vadd.f32 %v1281, %v1346
      %v1379 = vadd.f32 %v1282, %v1347
      %v1380 = vadd.f32 %v1283, %v1348
      %v1381 = vadd.f32 %v1284, %v1349
      %v1382 = vadd.f32 %v1285, %v1350
      %v1383 = vadd.f32 %v1286, %v1351
      %v1384 = vadd.f32 %v1287, %v1352
      %v1385 = vadd.f32 %v1288, %v1353
      %v1386 = vadd.f32 %v1289, %v1354
      %v1387 = vadd.f32 %v1290, %v1355
      %v1388 = vld [vmem:[%s1193 + $0x2] sm:$0xff]
      %v1389 = vld [vmem:[%s1193 + $0xa] sm:$0xff]
      %v1390 = vld [vmem:[%s1193 + $0x1a] sm:$0xff]
      %v1391 = vld [vmem:[%s1193 + $0x22] sm:$0xff]
      %v1392 = vld [vmem:[%s1193 + $0x32] sm:$0xff]
      %v1393 = vld [vmem:[%s1193 + $0x3a] sm:$0xff]
      %v1394 = vld [vmem:[%s1193 + $0x4a] sm:$0xff]
      %v1395 = vld [vmem:[%s1193 + $0x52] sm:$0xff]
      %v1396 = vld [vmem:[%s1193 + $0x62] sm:$0xff]
      %v1397 = vld [vmem:[%s1193 + $0x6a] sm:$0xff]
      %v1398 = vld [vmem:[%s1193 + $0x7a] sm:$0xff]
      %v1399 = vld [vmem:[%s1193 + $0x82] sm:$0xff]
      %v1400 = vld [vmem:[%s1193 + $0x92] sm:$0xff]
      %v1401 = vld [vmem:[%s1193 + $0x9a] sm:$0xff]
      %v1402 = vld [vmem:[%s1193 + $0xaa] sm:$0xff]
      %v1403 = vld [vmem:[%s1193 + $0xb2] sm:$0xff]
      %v1404 = vld [vmem:[%s1193 + $0xc2] sm:$0xff]
      %v1405 = vld [vmem:[%s1193 + $0xca] sm:$0xff]
      %v1406 = vld [vmem:[%s1193 + $0xda] sm:$0xff]
      %v1407 = vld [vmem:[%s1193 + $0xe2] sm:$0xff]
      %v1408 = vld [vmem:[%s1193 + $0xf2] sm:$0xff]
      %v1409 = vld [vmem:[%s1193 + $0xfa] sm:$0xff]
      %v1410 = vld [vmem:[%s1193 + $0x10a] sm:$0xff]
      %v1411 = vld [vmem:[%s1193 + $0x112] sm:$0xff]
      %v1412 = vld [vmem:[%s1193 + $0x122] sm:$0xff]
      %v1413 = vld [vmem:[%s1193 + $0x12a] sm:$0xff]
      %v1414 = vld [vmem:[%s1193 + $0x13a] sm:$0xff]
      %v1415 = vld [vmem:[%s1193 + $0x142] sm:$0xff]
      %v1416 = vld [vmem:[%s1193 + $0x152] sm:$0xff]
      %v1417 = vld [vmem:[%s1193 + $0x15a] sm:$0xff]
      %v1418 = vld [vmem:[%s1193 + $0x16a] sm:$0xff]
      %v1419 = vld [vmem:[%s1193 + $0x172] sm:$0xff]
      %v1420 = vperm.slane %v563, 0
      %v1421 = vmul.f32 %v1388, %v1420
      %v1422 = vmul.f32 %v1389, %v1420
      %v1423 = vmul.f32 %v1390, %v1420
      %v1424 = vmul.f32 %v1391, %v1420
      %v1425 = vmul.f32 %v1392, %v1420
      %v1426 = vmul.f32 %v1393, %v1420
      %v1427 = vmul.f32 %v1394, %v1420
      %v1428 = vmul.f32 %v1395, %v1420
      %v1429 = vmul.f32 %v1396, %v1420
      %v1430 = vmul.f32 %v1397, %v1420
      %v1431 = vmul.f32 %v1398, %v1420
      %v1432 = vmul.f32 %v1399, %v1420
      %v1433 = vmul.f32 %v1400, %v1420
      %v1434 = vmul.f32 %v1401, %v1420
      %v1435 = vmul.f32 %v1402, %v1420
      %v1436 = vmul.f32 %v1403, %v1420
      %v1437 = vmul.f32 %v1404, %v1420
      %v1438 = vmul.f32 %v1405, %v1420
      %v1439 = vmul.f32 %v1406, %v1420
      %v1440 = vmul.f32 %v1407, %v1420
      %v1441 = vmul.f32 %v1408, %v1420
      %v1442 = vmul.f32 %v1409, %v1420
      %v1443 = vmul.f32 %v1410, %v1420
      %v1444 = vmul.f32 %v1411, %v1420
      %v1445 = vmul.f32 %v1412, %v1420
      %v1446 = vmul.f32 %v1413, %v1420
      %v1447 = vmul.f32 %v1414, %v1420
      %v1448 = vmul.f32 %v1415, %v1420
      %v1449 = vmul.f32 %v1416, %v1420
      %v1450 = vmul.f32 %v1417, %v1420
      %v1451 = vmul.f32 %v1418, %v1420
      %v1452 = vmul.f32 %v1419, %v1420
      %v1453 = vadd.f32 %v1356, %v1421
      %v1454 = vadd.f32 %v1357, %v1422
      %v1455 = vadd.f32 %v1358, %v1423
      %v1456 = vadd.f32 %v1359, %v1424
      %v1457 = vadd.f32 %v1360, %v1425
      %v1458 = vadd.f32 %v1361, %v1426
      %v1459 = vadd.f32 %v1362, %v1427
      %v1460 = vadd.f32 %v1363, %v1428
      %v1461 = vadd.f32 %v1364, %v1429
      %v1462 = vadd.f32 %v1365, %v1430
      %v1463 = vadd.f32 %v1366, %v1431
      %v1464 = vadd.f32 %v1367, %v1432
      %v1465 = vadd.f32 %v1368, %v1433
      %v1466 = vadd.f32 %v1369, %v1434
      %v1467 = vadd.f32 %v1370, %v1435
      %v1468 = vadd.f32 %v1371, %v1436
      %v1469 = vadd.f32 %v1372, %v1437
      %v1470 = vadd.f32 %v1373, %v1438
      %v1471 = vadd.f32 %v1374, %v1439
      %v1472 = vadd.f32 %v1375, %v1440
      %v1473 = vadd.f32 %v1376, %v1441
      %v1474 = vadd.f32 %v1377, %v1442
      %v1475 = vadd.f32 %v1378, %v1443
      %v1476 = vadd.f32 %v1379, %v1444
      %v1477 = vadd.f32 %v1380, %v1445
      %v1478 = vadd.f32 %v1381, %v1446
      %v1479 = vadd.f32 %v1382, %v1447
      %v1480 = vadd.f32 %v1383, %v1448
      %v1481 = vadd.f32 %v1384, %v1449
      %v1482 = vadd.f32 %v1385, %v1450
      %v1483 = vadd.f32 %v1386, %v1451
      %v1484 = vadd.f32 %v1387, %v1452
      %v1485 = vld [vmem:[%s4] sm:$0x1]
      %v1487 = vperm.slane %v1485, 0
      %v1489 = vadd.f32 %v1453, %v1487
      %v1490 = vadd.f32 %v1454, %v1487
      %v1491 = vadd.f32 %v1455, %v1487
      %v1492 = vadd.f32 %v1456, %v1487
      %v1493 = vadd.f32 %v1457, %v1487
      %v1494 = vadd.f32 %v1458, %v1487
      %v1495 = vadd.f32 %v1459, %v1487
      %v1496 = vadd.f32 %v1460, %v1487
      %v1497 = vadd.f32 %v1461, %v1487
      %v1498 = vadd.f32 %v1462, %v1487
      %v1499 = vadd.f32 %v1463, %v1487
      %v1500 = vadd.f32 %v1464, %v1487
      %v1501 = vadd.f32 %v1465, %v1487
      %v1502 = vadd.f32 %v1466, %v1487
      %v1503 = vadd.f32 %v1467, %v1487
      %v1504 = vadd.f32 %v1468, %v1487
      %v1505 = vadd.f32 %v1469, %v1487
      %v1506 = vadd.f32 %v1470, %v1487
      %v1507 = vadd.f32 %v1471, %v1487
      %v1508 = vadd.f32 %v1472, %v1487
      %v1509 = vadd.f32 %v1473, %v1487
      %v1510 = vadd.f32 %v1474, %v1487
      %v1511 = vadd.f32 %v1475, %v1487
      %v1512 = vadd.f32 %v1476, %v1487
      %v1513 = vadd.f32 %v1477, %v1487
      %v1514 = vadd.f32 %v1478, %v1487
      %v1515 = vadd.f32 %v1479, %v1487
      %v1516 = vadd.f32 %v1480, %v1487
      %v1517 = vadd.f32 %v1481, %v1487
      %v1518 = vadd.f32 %v1482, %v1487
      %v1519 = vadd.f32 %v1483, %v1487
      %v1520 = vadd.f32 %v1484, %v1487
      %v1521 = vmax.f32 %v1489, 0.0
      %v1522 = vmax.f32 %v1490, 0.0
      %v1523 = vmax.f32 %v1491, 0.0
      %v1524 = vmax.f32 %v1492, 0.0
      %v1525 = vmax.f32 %v1493, 0.0
      %v1526 = vmax.f32 %v1494, 0.0
      %v1527 = vmax.f32 %v1495, 0.0
      %v1528 = vmax.f32 %v1496, 0.0
      %v1529 = vmax.f32 %v1497, 0.0
      %v1530 = vmax.f32 %v1498, 0.0
      %v1531 = vmax.f32 %v1499, 0.0
      %v1532 = vmax.f32 %v1500, 0.0
      %v1533 = vmax.f32 %v1501, 0.0
      %v1534 = vmax.f32 %v1502, 0.0
      %v1535 = vmax.f32 %v1503, 0.0
      %v1536 = vmax.f32 %v1504, 0.0
      %v1537 = vmax.f32 %v1505, 0.0
      %v1538 = vmax.f32 %v1506, 0.0
      %v1539 = vmax.f32 %v1507, 0.0
      %v1540 = vmax.f32 %v1508, 0.0
      %v1541 = vmax.f32 %v1509, 0.0
      %v1542 = vmax.f32 %v1510, 0.0
      %v1543 = vmax.f32 %v1511, 0.0
      %v1544 = vmax.f32 %v1512, 0.0
      %v1545 = vmax.f32 %v1513, 0.0
      %v1546 = vmax.f32 %v1514, 0.0
      %v1547 = vmax.f32 %v1515, 0.0
      %v1548 = vmax.f32 %v1516, 0.0
      %v1549 = vmax.f32 %v1517, 0.0
      %v1550 = vmax.f32 %v1518, 0.0
      %v1551 = vmax.f32 %v1519, 0.0
      %v1552 = vmax.f32 %v1520, 0.0
      %v1553 = vld [vmem:[%s5] sm:$0xff]
      %v1554 = vld [vmem:[%s5 + $0x8] sm:$0xff]
      %v1555 = vld [vmem:[%s5 + $0x10] sm:$0xff]
      %v1556 = vld [vmem:[%s6] sm:$0x1]
      %v1558 = vperm.slane %v1556, 0
      %v1561 = vsel %vm564, %v1521, 0
      %v1564 = vsel %vm564, %v1522, 0
      %v1567 = vsel %vm564, %v1523, 0
      %v1570 = vsel %vm564, %v1524, 0
      %v1573 = vsel %vm564, %v1525, 0
      %v1576 = vsel %vm564, %v1526, 0
      %v1579 = vsel %vm564, %v1527, 0
      %v1582 = vsel %vm564, %v1528, 0
      %v1585 = vsel %vm564, %v1529, 0
      %v1588 = vsel %vm564, %v1530, 0
      %v1591 = vsel %vm564, %v1531, 0
      %v1594 = vsel %vm564, %v1532, 0
      %v1597 = vsel %vm564, %v1533, 0
      %v1600 = vsel %vm564, %v1534, 0
      %v1603 = vsel %vm564, %v1535, 0
      %v1606 = vsel %vm564, %v1536, 0
      %v1609 = vsel %vm564, %v1537, 0
      %v1612 = vsel %vm564, %v1538, 0
      %v1615 = vsel %vm564, %v1539, 0
      %v1618 = vsel %vm564, %v1540, 0
      %v1621 = vsel %vm564, %v1541, 0
      %v1624 = vsel %vm564, %v1542, 0
      %v1627 = vsel %vm564, %v1543, 0
      %v1630 = vsel %vm564, %v1544, 0
      %v1633 = vsel %vm564, %v1545, 0
      %v1636 = vsel %vm564, %v1546, 0
      %v1639 = vsel %vm564, %v1547, 0
      %v1642 = vsel %vm564, %v1548, 0
      %v1645 = vsel %vm564, %v1549, 0
      %v1648 = vsel %vm564, %v1550, 0
      %v1651 = vsel %vm564, %v1551, 0
      %v1654 = vsel %vm564, %v1552, 0
      %1656 = vmatpush.msra.mxu0 0.0
      %1657 = vmatpush.msra.mxu0 0.0
      %1658 = vmatpush.msra.mxu0 0.0
      %1659 = vmatpush.msra.mxu0 0.0
      %1660 = vmatpush.msra.mxu0 0.0
      %1661 = vmatpush.msra.mxu0 0.0
      %1662 = vmatpush.msra.mxu0 0.0
      %1663 = vmatpush.msra.mxu0 0.0
      %1664 = vmatpush.msra.mxu0 0.0
      %1665 = vmatpush.msra.mxu0 0.0
      %1666 = vmatpush.msra.mxu0 0.0
      %1667 = vmatpush.msra.mxu0 0.0
      %1668 = vmatpush.msra.mxu0 0.0
      %1669 = vmatpush.msra.mxu0 %v1555
      %1670 = vmatpush.msra.mxu0 %v1554
      %1671 = vmatpush.msra.mxu0 %v1553
      %1672 = vmatmul.f32.gmra.mxu0 %v1561
      %v1673 = vpop.f32.mrf.mxu0
      %v1674 = vadd.f32 %v1558, %v1673
      %1675 = vmatmul.f32.gmra.mxu0 %v1564
      %v1676 = vpop.f32.mrf.mxu0
      %v1677 = vadd.f32 %v1558, %v1676
      %1678 = vmatmul.f32.gmra.mxu0 %v1567
      %v1679 = vpop.f32.mrf.mxu0
      %v1680 = vadd.f32 %v1558, %v1679
      %1681 = vmatmul.f32.gmra.mxu0 %v1570
      %v1682 = vpop.f32.mrf.mxu0
      %v1683 = vadd.f32 %v1558, %v1682
      %1684 = vmatmul.f32.gmra.mxu0 %v1573
      %v1685 = vpop.f32.mrf.mxu0
      %v1686 = vadd.f32 %v1558, %v1685
      %1687 = vmatmul.f32.gmra.mxu0 %v1576
      %v1688 = vpop.f32.mrf.mxu0
      %v1689 = vadd.f32 %v1558, %v1688
      %1690 = vmatmul.f32.gmra.mxu0 %v1579
      %v1691 = vpop.f32.mrf.mxu0
      %v1692 = vadd.f32 %v1558, %v1691
      %1693 = vmatmul.f32.gmra.mxu0 %v1582
      %v1694 = vpop.f32.mrf.mxu0
      %v1695 = vadd.f32 %v1558, %v1694
      %1696 = vmatmul.f32.gmra.mxu0 %v1585
      %v1697 = vpop.f32.mrf.mxu0
      %v1698 = vadd.f32 %v1558, %v1697
      %1699 = vmatmul.f32.gmra.mxu0 %v1588
      %v1700 = vpop.f32.mrf.mxu0
      %v1701 = vadd.f32 %v1558, %v1700
      %1702 = vmatmul.f32.gmra.mxu0 %v1591
      %v1703 = vpop.f32.mrf.mxu0
      %v1704 = vadd.f32 %v1558, %v1703
      %1705 = vmatmul.f32.gmra.mxu0 %v1594
      %v1706 = vpop.f32.mrf.mxu0
      %v1707 = vadd.f32 %v1558, %v1706
      %1708 = vmatmul.f32.gmra.mxu0 %v1597
      %v1709 = vpop.f32.mrf.mxu0
      %v1710 = vadd.f32 %v1558, %v1709
      %1711 = vmatmul.f32.gmra.mxu0 %v1600
      %v1712 = vpop.f32.mrf.mxu0
      %v1713 = vadd.f32 %v1558, %v1712
      %1714 = vmatmul.f32.gmra.mxu0 %v1603
      %v1715 = vpop.f32.mrf.mxu0
      %v1716 = vadd.f32 %v1558, %v1715
      %1717 = vmatmul.f32.gmra.mxu0 %v1606
      %v1718 = vpop.f32.mrf.mxu0
      %v1719 = vadd.f32 %v1558, %v1718
      %1720 = vmatmul.f32.gmra.mxu0 %v1609
      %v1721 = vpop.f32.mrf.mxu0
      %v1722 = vadd.f32 %v1558, %v1721
      %1723 = vmatmul.f32.gmra.mxu0 %v1612
      %v1724 = vpop.f32.mrf.mxu0
      %v1725 = vadd.f32 %v1558, %v1724
      %1726 = vmatmul.f32.gmra.mxu0 %v1615
      %v1727 = vpop.f32.mrf.mxu0
      %v1728 = vadd.f32 %v1558, %v1727
      %1729 = vmatmul.f32.gmra.mxu0 %v1618
      %v1730 = vpop.f32.mrf.mxu0
      %v1731 = vadd.f32 %v1558, %v1730
      %1732 = vmatmul.f32.gmra.mxu0 %v1621
      %v1733 = vpop.f32.mrf.mxu0
      %v1734 = vadd.f32 %v1558, %v1733
      %1735 = vmatmul.f32.gmra.mxu0 %v1624
      %v1736 = vpop.f32.mrf.mxu0
      %v1737 = vadd.f32 %v1558, %v1736
      %1738 = vmatmul.f32.gmra.mxu0 %v1627
      %v1739 = vpop.f32.mrf.mxu0
      %v1740 = vadd.f32 %v1558, %v1739
      %1741 = vmatmul.f32.gmra.mxu0 %v1630
      %v1742 = vpop.f32.mrf.mxu0
      %v1743 = vadd.f32 %v1558, %v1742
      %1744 = vmatmul.f32.gmra.mxu0 %v1633
      %v1745 = vpop.f32.mrf.mxu0
      %v1746 = vadd.f32 %v1558, %v1745
      %1747 = vmatmul.f32.gmra.mxu0 %v1636
      %v1748 = vpop.f32.mrf.mxu0
      %v1749 = vadd.f32 %v1558, %v1748
      %1750 = vmatmul.f32.gmra.mxu0 %v1639
      %v1751 = vpop.f32.mrf.mxu0
      %v1752 = vadd.f32 %v1558, %v1751
      %1753 = vmatmul.f32.gmra.mxu0 %v1642
      %v1754 = vpop.f32.mrf.mxu0
      %v1755 = vadd.f32 %v1558, %v1754
      %1756 = vmatmul.f32.gmra.mxu0 %v1645
      %v1757 = vpop.f32.mrf.mxu0
      %v1758 = vadd.f32 %v1558, %v1757
      %1759 = vmatmul.f32.gmra.mxu0 %v1648
      %v1760 = vpop.f32.mrf.mxu0
      %v1761 = vadd.f32 %v1558, %v1760
      %1762 = vmatmul.f32.gmra.mxu0 %v1651
      %v1763 = vpop.f32.mrf.mxu0
      %v1764 = vadd.f32 %v1558, %v1763
      %1765 = vmatmul.f32.gmra.mxu0 %v1654
      %v1766 = vpop.f32.mrf.mxu0
      %v1767 = vadd.f32 %v1558, %v1766
      %1768 = vdwg.mxu0
      %v1769 = vadd.f32 %v1674, %v279
      %v1770 = vadd.f32 %v1677, %v280
      %v1771 = vadd.f32 %v1680, %v281
      %v1772 = vadd.f32 %v1683, %v282
      %v1773 = vadd.f32 %v1686, %v283
      %v1774 = vadd.f32 %v1689, %v284
      %v1775 = vadd.f32 %v1692, %v285
      %v1776 = vadd.f32 %v1695, %v286
      %v1777 = vadd.f32 %v1698, %v287
      %v1778 = vadd.f32 %v1701, %v288
      %v1779 = vadd.f32 %v1704, %v289
      %v1780 = vadd.f32 %v1707, %v290
      %v1781 = vadd.f32 %v1710, %v291
      %v1782 = vadd.f32 %v1713, %v292
      %v1783 = vadd.f32 %v1716, %v293
      %v1784 = vadd.f32 %v1719, %v294
      %v1785 = vadd.f32 %v1722, %v295
      %v1786 = vadd.f32 %v1725, %v296
      %v1787 = vadd.f32 %v1728, %v297
      %v1788 = vadd.f32 %v1731, %v298
      %v1789 = vadd.f32 %v1734, %v299
      %v1790 = vadd.f32 %v1737, %v300
      %v1791 = vadd.f32 %v1740, %v301
      %v1792 = vadd.f32 %v1743, %v302
      %v1793 = vadd.f32 %v1746, %v303
      %v1794 = vadd.f32 %v1749, %v304
      %v1795 = vadd.f32 %v1752, %v305
      %v1796 = vadd.f32 %v1755, %v306
      %v1797 = vadd.f32 %v1758, %v307
      %v1798 = vadd.f32 %v1761, %v308
      %v1799 = vadd.f32 %v1764, %v309
      %v1800 = vadd.f32 %v1767, %v310
      %1801 = vst.msk [vmem:[%s278] sm:$0xff] %vm316, %v1769
      %1802 = vst.msk [vmem:[%s278 + $0x8] sm:$0xff] %vm316, %v1770
      %1803 = vst.msk [vmem:[%s278 + $0x10] sm:$0xff] %vm316, %v1771
      %1804 = vst.msk [vmem:[%s278 + $0x18] sm:$0xff] %vm316, %v1772
      %1805 = vst.msk [vmem:[%s278 + $0x20] sm:$0xff] %vm316, %v1773
      %1806 = vst.msk [vmem:[%s278 + $0x28] sm:$0xff] %vm316, %v1774
      %1807 = vst.msk [vmem:[%s278 + $0x30] sm:$0xff] %vm316, %v1775
      %1808 = vst.msk [vmem:[%s278 + $0x38] sm:$0xff] %vm316, %v1776
      %1809 = vst.msk [vmem:[%s278 + $0x40] sm:$0xff] %vm316, %v1777
      %1810 = vst.msk [vmem:[%s278 + $0x48] sm:$0xff] %vm316, %v1778
      %1811 = vst.msk [vmem:[%s278 + $0x50] sm:$0xff] %vm316, %v1779
      %1812 = vst.msk [vmem:[%s278 + $0x58] sm:$0xff] %vm316, %v1780
      %1813 = vst.msk [vmem:[%s278 + $0x60] sm:$0xff] %vm316, %v1781
      %1814 = vst.msk [vmem:[%s278 + $0x68] sm:$0xff] %vm316, %v1782
      %1815 = vst.msk [vmem:[%s278 + $0x70] sm:$0xff] %vm316, %v1783
      %1816 = vst.msk [vmem:[%s278 + $0x78] sm:$0xff] %vm316, %v1784
      %1817 = vst.msk [vmem:[%s278 + $0x80] sm:$0xff] %vm316, %v1785
      %1818 = vst.msk [vmem:[%s278 + $0x88] sm:$0xff] %vm316, %v1786
      %1819 = vst.msk [vmem:[%s278 + $0x90] sm:$0xff] %vm316, %v1787
      %1820 = vst.msk [vmem:[%s278 + $0x98] sm:$0xff] %vm316, %v1788
      %1821 = vst.msk [vmem:[%s278 + $0xa0] sm:$0xff] %vm316, %v1789
      %1822 = vst.msk [vmem:[%s278 + $0xa8] sm:$0xff] %vm316, %v1790
      %1823 = vst.msk [vmem:[%s278 + $0xb0] sm:$0xff] %vm316, %v1791
      %1824 = vst.msk [vmem:[%s278 + $0xb8] sm:$0xff] %vm316, %v1792
      %1825 = vst.msk [vmem:[%s278 + $0xc0] sm:$0xff] %vm316, %v1793
      %1826 = vst.msk [vmem:[%s278 + $0xc8] sm:$0xff] %vm316, %v1794
      %1827 = vst.msk [vmem:[%s278 + $0xd0] sm:$0xff] %vm316, %v1795
      %1828 = vst.msk [vmem:[%s278 + $0xd8] sm:$0xff] %vm316, %v1796
      %1829 = vst.msk [vmem:[%s278 + $0xe0] sm:$0xff] %vm316, %v1797
      %1830 = vst.msk [vmem:[%s278 + $0xe8] sm:$0xff] %vm316, %v1798
      %1831 = vst.msk [vmem:[%s278 + $0xf0] sm:$0xff] %vm316, %v1799
      %1832 = vst.msk [vmem:[%s278 + $0xf8] sm:$0xff] %vm316, %v1800
      %p1833 = scmp.lt.s32.totalorder %s18, 1
      %s1834 = scalar_select %p1833, %s18, 1
      %s1835 = smul.addr %s1834, 32
      %s1836 = smul.addr %s1835, 8
      %s1837 = scalar_lea.vmem %s7, %s1836
      // Predicated region
      $region49: #{tpu_custom_call.1} parent=47 // pred_check
        %p1838 = pneg %p188
      $region50: #{tpu_custom_call.1} parent=47 // pred_check_branch
        %1840 = sbr.rel (%p1838) target = $region52
      $region51: #{tpu_custom_call.1} parent=47 // pred_region
        _
      $region52: #{tpu_custom_call.1} parent=47 // pred_fallthru
        _
    $region48: #{tpu_custom_call.1} parent=5 // pred_fallthru
      _
    %p1841 = scmp.le.s32.totalorder 2, %s13
    // Predicated region
    $region53: #{tpu_custom_call.1} parent=5 // pred_check
      %p1842 = pneg %p1841
    $region54: #{tpu_custom_call.1} parent=5 // pred_check_branch
      %1844 = sbr.rel (%p1842) target = $region56
    $region55: #{tpu_custom_call.1} parent=5 // pred_region
      %s1845 = ssub.s32 %s13, 2
      // Predicated region
      $region57: #{tpu_custom_call.1} parent=55 // pred_check
        %p1846 = pneg %p194
      $region58: #{tpu_custom_call.1} parent=55 // pred_check_branch
        %1848 = sbr.rel (%p1846) target = $region60
      $region59: #{tpu_custom_call.1} parent=55 // pred_region
        %p1849 = scmp.lt.s32.totalorder %s19, 1
        %s1850 = scalar_select %p1849, %s19, 1
        %s1851 = smul.addr %s1850, 32
        %s1852 = smul.addr %s1851, 8
        %s1853 = scalar_lea.vmem %s7, %s1852
      $region60: #{tpu_custom_call.1} parent=55 // pred_fallthru
        _
    $region56: #{tpu_custom_call.1} parent=5 // pred_fallthru
      _
  $region6: #{tpu_custom_call.1} parent=0 // loop_footer
    %s17 = sadd.s32 1, %s13
  $region7: #{tpu_custom_call.1} parent=0 // loop_footer_branch
    %12 = sbr.rel target = $region3
  $region8: #{tpu_custom_call.1} parent=0 // loop_exit
    _

</llo_original>
